<compile_context>
chip_gen: v6e
topology: v6e:2x2x1
jax: 0.10.0
libtpu: 0.0.40
codegen_flags: <defaults>
</compile_context>

<pallas_src>
import math

import jax
import jax.numpy as jnp
from jax import lax
from jax.experimental import pallas as pl
from jax.experimental.pallas import tpu as pltpu

# ---- static model config (small, consistent with the module) ----
B = 2          # batch
S = 8          # sequence length (num hops + 1 in NAGphormer)
H = 32         # hidden_size
FFN = 64       # ffn_size
NUM_HEADS = 4
DH = H // NUM_HEADS
LN_EPS = 1e-5  # PyTorch nn.LayerNorm default

# rows of the packed (8, 128) bias slab
_ROW_BQKV, _ROW_BO, _ROW_B1, _ROW_B2 = 0, 1, 2, 3


def _gelu_exact(x):
    # PyTorch nn.GELU() default = exact erf-based GELU.
    return 0.5 * x * (1.0 + lax.erf(x * (1.0 / math.sqrt(2.0))))


def _make_kernel(tb):
    """Kernel processing `tb` whole batches (tb*S rows) per grid step."""
    rows = tb * S

    def kernel(x_ref, vec_ref, wqkv_ref, wo_ref, w1_ref, w2_ref, out_ref):
        x = x_ref[...]                                   # (rows, H)
        vecs = vec_ref[...]                              # (8, 128)
        bqkv = vecs[_ROW_BQKV:_ROW_BQKV + 1, 0:3 * H]
        bo = vecs[_ROW_BO:_ROW_BO + 1, 0:H]
        b1 = vecs[_ROW_B1:_ROW_B1 + 1, 0:FFN]
        b2 = vecs[_ROW_B2:_ROW_B2 + 1, 0:H]

        # ---- self_attention_norm (gamma/beta folded into Wqkv/bqkv) ----
        mu = jnp.mean(x, axis=-1, keepdims=True)
        xc = x - mu
        y = xc * lax.rsqrt(jnp.mean(xc * xc, axis=-1, keepdims=True) + LN_EPS)

        # ---- fused (pre-scaled) Q/K/V projection: one MXU push ----
        qkv = jnp.dot(y, wqkv_ref[...],
                      preferred_element_type=jnp.float32) + bqkv

        q3 = qkv[:, 0:H].reshape(tb, S, H)               # query scale folded in
        k3 = qkv[:, H:2 * H].reshape(tb, S, H)
        v3 = qkv[:, 2 * H:3 * H].reshape(tb, S, H)

        # heads -> batch axis: (NUM_HEADS*tb, S, DH), index = h*tb + b
        qh = jnp.concatenate(
            [q3[:, :, h * DH:(h + 1) * DH] for h in range(NUM_HEADS)], axis=0)
        kh = jnp.concatenate(
            [k3[:, :, h * DH:(h + 1) * DH] for h in range(NUM_HEADS)], axis=0)
        vh = jnp.concatenate(
            [v3[:, :, h * DH:(h + 1) * DH] for h in range(NUM_HEADS)], axis=0)

        # ---- single batched attention: 2 einsums + 1 softmax chain ----
        s = jnp.einsum("bqd,bkd->bqk", qh, kh,
                       preferred_element_type=jnp.float32)       # (NH*tb,S,S)
        s = s - jnp.max(s, axis=-1, keepdims=True)
        p = jnp.exp(s)
        p = p * pl.reciprocal(jnp.sum(p, axis=-1, keepdims=True), approx=True)
        ch = jnp.einsum("bqk,bkd->bqd", p, vh,
                        preferred_element_type=jnp.float32)      # (NH*tb,S,DH)

        # back to (rows, H), head-major along lanes (matches PyTorch view)
        ctx = jnp.concatenate(
            [ch[h * tb:(h + 1) * tb] for h in range(NUM_HEADS)], axis=-1)
        ctx = ctx.reshape(rows, H)

        attn_out = jnp.dot(ctx, wo_ref[...],
                           preferred_element_type=jnp.float32) + bo

        # ---- residual 1 (dropout = identity) ----
        x1 = x + attn_out

        # ---- ffn_norm (gamma/beta folded into W1/b1) ----
        mu2 = jnp.mean(x1, axis=-1, keepdims=True)
        xc2 = x1 - mu2
        y2 = xc2 * lax.rsqrt(jnp.mean(xc2 * xc2, axis=-1, keepdims=True) + LN_EPS)

        # ---- FFN: linear -> GELU -> linear ----
        hdn = _gelu_exact(
            jnp.dot(y2, w1_ref[...], preferred_element_type=jnp.float32) + b1)
        ffn_out = jnp.dot(hdn, w2_ref[...],
                          preferred_element_type=jnp.float32) + b2

        # ---- residual 2 (dropout = identity) ----
        out_ref[...] = (x1 + ffn_out).astype(out_ref.dtype)

    return kernel


def _prepare_inputs(p):
    """Host-side weight prep: fuse QKV, fold LN gamma/beta + query scale."""
    scale = DH ** (-0.5)
    wqkv = jnp.concatenate([p["wq"] * scale, p["wk"], p["wv"]], axis=1)   # (H,3H)
    bqkv = jnp.concatenate([p["bq"][0] * scale, p["bk"][0], p["bv"][0]])  # (3H,)

    # fold self_attention_norm gamma/beta into the fused QKV projection
    wqkv_f = wqkv * p["ln1_g"][0][:, None]
    bqkv_f = bqkv + p["ln1_b"][0] @ wqkv

    # fold ffn_norm gamma/beta into the first FFN linear
    w1_f = p["w1"] * p["ln2_g"][0][:, None]
    b1_f = p["b1"][0] + p["ln2_b"][0] @ p["w1"]

    slab = jnp.zeros((8, 128), jnp.float32)
    slab = slab.at[_ROW_BQKV, 0:3 * H].set(bqkv_f)
    slab = slab.at[_ROW_BO, 0:H].set(p["bo"][0])
    slab = slab.at[_ROW_B1, 0:FFN].set(b1_f)
    slab = slab.at[_ROW_B2, 0:H].set(p["b2"][0])
    return wqkv_f, slab, w1_f


def encoder_layer_pallas(x, params, *, target_rows=256):
    """x: (B, S, H) float32. params: dict of weights (see init_params)."""
    bx, sx, hx = x.shape
    assert (sx, hx) == (S, H)

    # batch-tile size: keep whole batches together, aim for >=target_rows rows
    tb = min(bx, max(1, target_rows // S))
    while bx % tb:
        tb -= 1
    rows = tb * S
    grid = (bx // tb,)

    wqkv_f, vec_slab, w1_f = _prepare_inputs(params)
    x2 = x.reshape(bx * S, H)

    full = lambda shape: pl.BlockSpec(shape, lambda i: (0, 0))
    fn = pl.pallas_call(
        _make_kernel(tb),
        out_shape=jax.ShapeDtypeStruct((bx * S, H), jnp.float32),
        grid_spec=pltpu.PrefetchScalarGridSpec(
            num_scalar_prefetch=0,
            grid=grid,
            in_specs=[
                pl.BlockSpec((rows, H), lambda i: (i, 0)),  # activation batch-tile
                full((8, 128)),                             # packed folded biases
                full((H, 3 * H)),                           # fused Wqkv (LN1+scale folded)
                full((H, H)),                               # Wo
                full((H, FFN)),                             # W1 (LN2 folded)
                full((FFN, H)),                             # W2
            ],
            out_specs=pl.BlockSpec((rows, H), lambda i: (i, 0)),
        ),
        compiler_params=pltpu.CompilerParams(
            dimension_semantics=("parallel",)),   # independent batch tiles
    )
    out = fn(x2, vec_slab, wqkv_f, params["wo"], w1_f, params["w2"])
    return out.reshape(bx, S, H)


def encoder_layer_reference(x, p):
    """Pure-JAX reference (same math, mirrors the PyTorch module)."""
    def ln(z, g, b):
        mu = jnp.mean(z, axis=-1, keepdims=True)
        var = jnp.mean((z - mu) ** 2, axis=-1, keepdims=True)
        return (z - mu) / jnp.sqrt(var + LN_EPS) * g + b

    y = ln(x, p["ln1_g"], p["ln1_b"])
    q = y @ p["wq"] + p["bq"]
    k = y @ p["wk"] + p["bk"]
    v = y @ p["wv"] + p["bv"]
    q = q.reshape(B, S, NUM_HEADS, DH).transpose(0, 2, 1, 3) * (DH ** -0.5)
    k = k.reshape(B, S, NUM_HEADS, DH).transpose(0, 2, 1, 3)
    v = v.reshape(B, S, NUM_HEADS, DH).transpose(0, 2, 1, 3)
    s = jnp.einsum("bhqd,bhkd->bhqk", q, k)
    pattn = jax.nn.softmax(s, axis=-1)
    ctx = jnp.einsum("bhqk,bhkd->bhqd", pattn, v)
    ctx = ctx.transpose(0, 2, 1, 3).reshape(B, S, H)
    attn_out = ctx @ p["wo"] + p["bo"]
    x1 = x + attn_out
    y2 = ln(x1, p["ln2_g"], p["ln2_b"])
    hdn = _gelu_exact(y2 @ p["w1"] + p["b1"])
    ffn_out = hdn @ p["w2"] + p["b2"]
    return x1 + ffn_out


def init_params(key):
    ks = jax.random.split(key, 12)
    sd = lambda fan_in: 1.0 / math.sqrt(fan_in)
    u = lambda k, shape, bound: jax.random.uniform(
        k, shape, jnp.float32, -bound, bound)
    return {
        "ln1_g": jnp.ones((1, H), jnp.float32),
        "ln1_b": jnp.zeros((1, H), jnp.float32),
        "wq": u(ks[0], (H, H), sd(H)), "bq": u(ks[1], (1, H), sd(H)),
        "wk": u(ks[2], (H, H), sd(H)), "bk": u(ks[3], (1, H), sd(H)),
        "wv": u(ks[4], (H, H), sd(H)), "bv": u(ks[5], (1, H), sd(H)),
        "wo": u(ks[6], (H, H), sd(H)), "bo": u(ks[7], (1, H), sd(H)),
        "ln2_g": jnp.ones((1, H), jnp.float32),
        "ln2_b": jnp.zeros((1, H), jnp.float32),
        "w1": u(ks[8], (H, FFN), sd(H)), "b1": u(ks[9], (1, FFN), sd(H)),
        "w2": u(ks[10], (FFN, H), sd(FFN)), "b2": u(ks[11], (1, H), sd(FFN)),
    }


if __name__ == "__main__":
    key = jax.random.PRNGKey(0)
    kx, kp = jax.random.split(key)
    x = jax.random.normal(kx, (B, S, H), jnp.float32)
    params = init_params(kp)

    out = encoder_layer_pallas(x, params)
    out = jax.block_until_ready(out)

    ref = encoder_layer_reference(x, params)
    assert out.shape == (B, S, H)
    # approx-reciprocal softmax + LN folding perturb numerics slightly vs exact
    assert jnp.allclose(out, ref, atol=2e-3, rtol=2e-3), (
        float(jnp.max(jnp.abs(out - ref))))
    print("KERNEL_OK")
</pallas_src>

<mosaic_0001>
module attributes {stable_mosaic.version = 11 : i64} {
  func.func @kernel(%arg0: i32, %arg1: memref<16x32xf32, #tpu.memory_space<vmem>>, %arg2: memref<8x128xf32, #tpu.memory_space<vmem>>, %arg3: memref<32x96xf32, #tpu.memory_space<vmem>>, %arg4: memref<32x32xf32, #tpu.memory_space<vmem>>, %arg5: memref<32x64xf32, #tpu.memory_space<vmem>>, %arg6: memref<64x32xf32, #tpu.memory_space<vmem>>, %arg7: memref<16x32xf32, #tpu.memory_space<vmem>>) attributes {dimension_semantics = [#tpu.dimension_semantics<parallel>], iteration_bounds = array<i64: 1>, scalar_prefetch = 0 : i64, scratch_operands = 0 : i64, tpu.core_type = #tpu.core_type<tc>, window_params = [{transform_indices = @transform_0, window_bounds = array<i64: 16, 32>}, {pipeline_mode = #tpu.pipeline_mode<synchronous>, transform_indices = @transform_1, window_bounds = array<i64: 8, 128>}, {pipeline_mode = #tpu.pipeline_mode<synchronous>, transform_indices = @transform_2, window_bounds = array<i64: 32, 96>}, {pipeline_mode = #tpu.pipeline_mode<synchronous>, transform_indices = @transform_3, window_bounds = array<i64: 32, 32>}, {pipeline_mode = #tpu.pipeline_mode<synchronous>, transform_indices = @transform_4, window_bounds = array<i64: 32, 64>}, {pipeline_mode = #tpu.pipeline_mode<synchronous>, transform_indices = @transform_5, window_bounds = array<i64: 64, 32>}, {transform_indices = @transform_6, window_bounds = array<i64: 16, 32>}]} {
    %c0 = arith.constant 0 : index
    %c0_0 = arith.constant 0 : index
    %0 = vector.load %arg1[%c0, %c0_0] : memref<16x32xf32, #tpu.memory_space<vmem>>, vector<16x32xf32>
    %c0_1 = arith.constant 0 : index
    %c0_2 = arith.constant 0 : index
    %1 = vector.load %arg2[%c0_1, %c0_2] : memref<8x128xf32, #tpu.memory_space<vmem>>, vector<8x128xf32>
    %2 = vector.extract_strided_slice %1 {offsets = [0, 0], sizes = [1, 96], strides = [1, 1]} : vector<8x128xf32> to vector<1x96xf32>
    %3 = vector.extract_strided_slice %1 {offsets = [1, 0], sizes = [1, 32], strides = [1, 1]} : vector<8x128xf32> to vector<1x32xf32>
    %4 = vector.extract_strided_slice %1 {offsets = [2, 0], sizes = [1, 64], strides = [1, 1]} : vector<8x128xf32> to vector<1x64xf32>
    %5 = vector.extract_strided_slice %1 {offsets = [3, 0], sizes = [1, 32], strides = [1, 1]} : vector<8x128xf32> to vector<1x32xf32>
    %cst = arith.constant dense<0.000000e+00> : vector<16xf32>
    %6 = vector.multi_reduction <add>, %0, %cst [1] : vector<16x32xf32> to vector<16xf32>
    %7 = vector.shape_cast %6 : vector<16xf32> to vector<16x1xf32>
    %cst_3 = arith.constant 3.200000e+01 : f32
    %8 = vector.broadcast %cst_3 : f32 to vector<16x1xf32>
    %9 = arith.divf %7, %8 : vector<16x1xf32>
    %10 = vector.broadcast %9 : vector<16x1xf32> to vector<16x32xf32>
    %11 = arith.subf %0, %10 : vector<16x32xf32>
    %12 = arith.mulf %11, %11 : vector<16x32xf32>
    %cst_4 = arith.constant dense<0.000000e+00> : vector<16xf32>
    %13 = vector.multi_reduction <add>, %12, %cst_4 [1] : vector<16x32xf32> to vector<16xf32>
    %14 = vector.shape_cast %13 : vector<16xf32> to vector<16x1xf32>
    %cst_5 = arith.constant 3.200000e+01 : f32
    %15 = vector.broadcast %cst_5 : f32 to vector<16x1xf32>
    %16 = arith.divf %14, %15 : vector<16x1xf32>
    %cst_6 = arith.constant 9.99999974E-6 : f32
    %17 = vector.broadcast %cst_6 : f32 to vector<16x1xf32>
    %18 = arith.addf %16, %17 : vector<16x1xf32>
    %19 = math.rsqrt %18 : vector<16x1xf32>
    %20 = vector.broadcast %19 : vector<16x1xf32> to vector<16x32xf32>
    %21 = arith.mulf %11, %20 : vector<16x32xf32>
    %c0_7 = arith.constant 0 : index
    %c0_8 = arith.constant 0 : index
    %22 = vector.load %arg3[%c0_7, %c0_8] : memref<32x96xf32, #tpu.memory_space<vmem>>, vector<32x96xf32>
    %cst_9 = arith.constant dense<0.000000e+00> : vector<16x96xf32>
    %23 = tpu.matmul %21, %22, %cst_9 {dimension_numbers = #tpu.dot_dimension_numbers<[1], [0], [0], [1], [0, 0, 1, 1], [], []>} : vector<16x32xf32>, vector<32x96xf32>, vector<16x96xf32> -> vector<16x96xf32>
    %24 = vector.broadcast %2 : vector<1x96xf32> to vector<16x96xf32>
    %25 = arith.addf %23, %24 : vector<16x96xf32>
    %26 = vector.extract_strided_slice %25 {offsets = [0, 0], sizes = [16, 32], strides = [1, 1]} : vector<16x96xf32> to vector<16x32xf32>
    %27 = vector.shape_cast %26 : vector<16x32xf32> to vector<2x8x32xf32>
    %28 = vector.extract_strided_slice %25 {offsets = [0, 32], sizes = [16, 32], strides = [1, 1]} : vector<16x96xf32> to vector<16x32xf32>
    %29 = vector.shape_cast %28 : vector<16x32xf32> to vector<2x8x32xf32>
    %30 = vector.extract_strided_slice %25 {offsets = [0, 64], sizes = [16, 32], strides = [1, 1]} : vector<16x96xf32> to vector<16x32xf32>
    %31 = vector.shape_cast %30 : vector<16x32xf32> to vector<2x8x32xf32>
    %32 = vector.extract_strided_slice %27 {offsets = [0, 0, 0], sizes = [2, 8, 8], strides = [1, 1, 1]} : vector<2x8x32xf32> to vector<2x8x8xf32>
    %33 = vector.extract_strided_slice %27 {offsets = [0, 0, 8], sizes = [2, 8, 8], strides = [1, 1, 1]} : vector<2x8x32xf32> to vector<2x8x8xf32>
    %34 = vector.extract_strided_slice %27 {offsets = [0, 0, 16], sizes = [2, 8, 8], strides = [1, 1, 1]} : vector<2x8x32xf32> to vector<2x8x8xf32>
    %35 = vector.extract_strided_slice %27 {offsets = [0, 0, 24], sizes = [2, 8, 8], strides = [1, 1, 1]} : vector<2x8x32xf32> to vector<2x8x8xf32>
    %36 = tpu.concatenate %32, %33, %34, %35 in 0 : vector<2x8x8xf32>, vector<2x8x8xf32>, vector<2x8x8xf32>, vector<2x8x8xf32> -> vector<8x8x8xf32>
    %37 = vector.extract_strided_slice %29 {offsets = [0, 0, 0], sizes = [2, 8, 8], strides = [1, 1, 1]} : vector<2x8x32xf32> to vector<2x8x8xf32>
    %38 = vector.extract_strided_slice %29 {offsets = [0, 0, 8], sizes = [2, 8, 8], strides = [1, 1, 1]} : vector<2x8x32xf32> to vector<2x8x8xf32>
    %39 = vector.extract_strided_slice %29 {offsets = [0, 0, 16], sizes = [2, 8, 8], strides = [1, 1, 1]} : vector<2x8x32xf32> to vector<2x8x8xf32>
    %40 = vector.extract_strided_slice %29 {offsets = [0, 0, 24], sizes = [2, 8, 8], strides = [1, 1, 1]} : vector<2x8x32xf32> to vector<2x8x8xf32>
    %41 = tpu.concatenate %37, %38, %39, %40 in 0 : vector<2x8x8xf32>, vector<2x8x8xf32>, vector<2x8x8xf32>, vector<2x8x8xf32> -> vector<8x8x8xf32>
    %42 = vector.extract_strided_slice %31 {offsets = [0, 0, 0], sizes = [2, 8, 8], strides = [1, 1, 1]} : vector<2x8x32xf32> to vector<2x8x8xf32>
    %43 = vector.extract_strided_slice %31 {offsets = [0, 0, 8], sizes = [2, 8, 8], strides = [1, 1, 1]} : vector<2x8x32xf32> to vector<2x8x8xf32>
    %44 = vector.extract_strided_slice %31 {offsets = [0, 0, 16], sizes = [2, 8, 8], strides = [1, 1, 1]} : vector<2x8x32xf32> to vector<2x8x8xf32>
    %45 = vector.extract_strided_slice %31 {offsets = [0, 0, 24], sizes = [2, 8, 8], strides = [1, 1, 1]} : vector<2x8x32xf32> to vector<2x8x8xf32>
    %46 = tpu.concatenate %42, %43, %44, %45 in 0 : vector<2x8x8xf32>, vector<2x8x8xf32>, vector<2x8x8xf32>, vector<2x8x8xf32> -> vector<8x8x8xf32>
    "tpu.trace_start"() <{level = 10 : i32, message = "bqd,bkd->bqk"}> : () -> ()
    %cst_10 = arith.constant dense<0.000000e+00> : vector<8x8x8xf32>
    %47 = tpu.matmul %36, %41, %cst_10 {dimension_numbers = #tpu.dot_dimension_numbers<[2], [2], [1], [1], [0, 0, 0, 1, 1, 1], [0], [0]>} : vector<8x8x8xf32>, vector<8x8x8xf32>, vector<8x8x8xf32> -> vector<8x8x8xf32>
    "tpu.trace_stop"() : () -> ()
    %cst_11 = arith.constant dense<0xFF800000> : vector<8x8xf32>
    %48 = vector.multi_reduction <maximumf>, %47, %cst_11 [2] : vector<8x8x8xf32> to vector<8x8xf32>
    %49 = vector.shape_cast %48 : vector<8x8xf32> to vector<8x8x1xf32>
    %50 = vector.broadcast %49 : vector<8x8x1xf32> to vector<8x8x8xf32>
    %51 = arith.subf %47, %50 : vector<8x8x8xf32>
    %52 = math.exp %51 : vector<8x8x8xf32>
    %cst_12 = arith.constant dense<0.000000e+00> : vector<8x8xf32>
    %53 = vector.multi_reduction <add>, %52, %cst_12 [2] : vector<8x8x8xf32> to vector<8x8xf32>
    %54 = vector.shape_cast %53 : vector<8x8xf32> to vector<8x8x1xf32>
    %55 = tpu.reciprocal %54 {approx = true} : vector<8x8x1xf32> -> vector<8x8x1xf32>
    %56 = vector.broadcast %55 : vector<8x8x1xf32> to vector<8x8x8xf32>
    %57 = arith.mulf %52, %56 : vector<8x8x8xf32>
    "tpu.trace_start"() <{level = 10 : i32, message = "bqk,bkd->bqd"}> : () -> ()
    %cst_13 = arith.constant dense<0.000000e+00> : vector<8x8x8xf32>
    %58 = tpu.matmul %57, %46, %cst_13 {dimension_numbers = #tpu.dot_dimension_numbers<[2], [1], [1], [2], [0, 0, 0, 1, 1, 2], [0], [0]>} : vector<8x8x8xf32>, vector<8x8x8xf32>, vector<8x8x8xf32> -> vector<8x8x8xf32>
    "tpu.trace_stop"() : () -> ()
    %59 = vector.extract_strided_slice %58 {offsets = [0, 0, 0], sizes = [2, 8, 8], strides = [1, 1, 1]} : vector<8x8x8xf32> to vector<2x8x8xf32>
    %60 = vector.extract_strided_slice %58 {offsets = [2, 0, 0], sizes = [2, 8, 8], strides = [1, 1, 1]} : vector<8x8x8xf32> to vector<2x8x8xf32>
    %61 = vector.extract_strided_slice %58 {offsets = [4, 0, 0], sizes = [2, 8, 8], strides = [1, 1, 1]} : vector<8x8x8xf32> to vector<2x8x8xf32>
    %62 = vector.extract_strided_slice %58 {offsets = [6, 0, 0], sizes = [2, 8, 8], strides = [1, 1, 1]} : vector<8x8x8xf32> to vector<2x8x8xf32>
    %63 = tpu.concatenate %59, %60, %61, %62 in 2 : vector<2x8x8xf32>, vector<2x8x8xf32>, vector<2x8x8xf32>, vector<2x8x8xf32> -> vector<2x8x32xf32>
    %64 = vector.shape_cast %63 : vector<2x8x32xf32> to vector<16x32xf32>
    %c0_14 = arith.constant 0 : index
    %c0_15 = arith.constant 0 : index
    %65 = vector.load %arg4[%c0_14, %c0_15] : memref<32x32xf32, #tpu.memory_space<vmem>>, vector<32x32xf32>
    %cst_16 = arith.constant dense<0.000000e+00> : vector<16x32xf32>
    %66 = tpu.matmul %64, %65, %cst_16 {dimension_numbers = #tpu.dot_dimension_numbers<[1], [0], [0], [1], [0, 0, 1, 1], [], []>} : vector<16x32xf32>, vector<32x32xf32>, vector<16x32xf32> -> vector<16x32xf32>
    %67 = vector.broadcast %3 : vector<1x32xf32> to vector<16x32xf32>
    %68 = arith.addf %66, %67 : vector<16x32xf32>
    %69 = arith.addf %0, %68 : vector<16x32xf32>
    %cst_17 = arith.constant dense<0.000000e+00> : vector<16xf32>
    %70 = vector.multi_reduction <add>, %69, %cst_17 [1] : vector<16x32xf32> to vector<16xf32>
    %71 = vector.shape_cast %70 : vector<16xf32> to vector<16x1xf32>
    %cst_18 = arith.constant 3.200000e+01 : f32
    %72 = vector.broadcast %cst_18 : f32 to vector<16x1xf32>
    %73 = arith.divf %71, %72 : vector<16x1xf32>
    %74 = vector.broadcast %73 : vector<16x1xf32> to vector<16x32xf32>
    %75 = arith.subf %69, %74 : vector<16x32xf32>
    %76 = arith.mulf %75, %75 : vector<16x32xf32>
    %cst_19 = arith.constant dense<0.000000e+00> : vector<16xf32>
    %77 = vector.multi_reduction <add>, %76, %cst_19 [1] : vector<16x32xf32> to vector<16xf32>
    %78 = vector.shape_cast %77 : vector<16xf32> to vector<16x1xf32>
    %cst_20 = arith.constant 3.200000e+01 : f32
    %79 = vector.broadcast %cst_20 : f32 to vector<16x1xf32>
    %80 = arith.divf %78, %79 : vector<16x1xf32>
    %cst_21 = arith.constant 9.99999974E-6 : f32
    %81 = vector.broadcast %cst_21 : f32 to vector<16x1xf32>
    %82 = arith.addf %80, %81 : vector<16x1xf32>
    %83 = math.rsqrt %82 : vector<16x1xf32>
    %84 = vector.broadcast %83 : vector<16x1xf32> to vector<16x32xf32>
    %85 = arith.mulf %75, %84 : vector<16x32xf32>
    %c0_22 = arith.constant 0 : index
    %c0_23 = arith.constant 0 : index
    %86 = vector.load %arg5[%c0_22, %c0_23] : memref<32x64xf32, #tpu.memory_space<vmem>>, vector<32x64xf32>
    %cst_24 = arith.constant dense<0.000000e+00> : vector<16x64xf32>
    %87 = tpu.matmul %85, %86, %cst_24 {dimension_numbers = #tpu.dot_dimension_numbers<[1], [0], [0], [1], [0, 0, 1, 1], [], []>} : vector<16x32xf32>, vector<32x64xf32>, vector<16x64xf32> -> vector<16x64xf32>
    %88 = vector.broadcast %4 : vector<1x64xf32> to vector<16x64xf32>
    %89 = arith.addf %87, %88 : vector<16x64xf32>
    %cst_25 = arith.constant 5.000000e-01 : f32
    %90 = vector.broadcast %cst_25 : f32 to vector<16x64xf32>
    %91 = arith.mulf %90, %89 : vector<16x64xf32>
    %cst_26 = arith.constant 0.707106769 : f32
    %92 = vector.broadcast %cst_26 : f32 to vector<16x64xf32>
    %93 = arith.mulf %89, %92 : vector<16x64xf32>
    %94 = math.erf %93 : vector<16x64xf32>
    %cst_27 = arith.constant 1.000000e+00 : f32
    %95 = vector.broadcast %cst_27 : f32 to vector<16x64xf32>
    %96 = arith.addf %95, %94 : vector<16x64xf32>
    %97 = arith.mulf %91, %96 : vector<16x64xf32>
    %c0_28 = arith.constant 0 : index
    %c0_29 = arith.constant 0 : index
    %98 = vector.load %arg6[%c0_28, %c0_29] : memref<64x32xf32, #tpu.memory_space<vmem>>, vector<64x32xf32>
    %cst_30 = arith.constant dense<0.000000e+00> : vector<16x32xf32>
    %99 = tpu.matmul %97, %98, %cst_30 {dimension_numbers = #tpu.dot_dimension_numbers<[1], [0], [0], [1], [0, 0, 1, 1], [], []>} : vector<16x64xf32>, vector<64x32xf32>, vector<16x32xf32> -> vector<16x32xf32>
    %100 = vector.broadcast %5 : vector<1x32xf32> to vector<16x32xf32>
    %101 = arith.addf %99, %100 : vector<16x32xf32>
    %102 = arith.addf %69, %101 : vector<16x32xf32>
    %c0_31 = arith.constant 0 : index
    %c0_32 = arith.constant 0 : index
    %103 = vector.load %arg7[%c0_31, %c0_32] : memref<16x32xf32, #tpu.memory_space<vmem>>, vector<16x32xf32>
    tpu.vector_store %arg7[%c0_31, %c0_32], %102 {strides = array<i32>} : memref<16x32xf32, #tpu.memory_space<vmem>>, vector<16x32xf32>,
    return
  }
  func.func @transform_0(%arg0: i32) -> (i32, i32) {
    %c0_i32 = arith.constant 0 : i32
    %c0_i32_0 = arith.constant 0 : i32
    return %arg0, %c0_i32 : i32, i32
  }
  func.func @transform_1(%arg0: i32) -> (i32, i32) {
    %c0_i32 = arith.constant 0 : i32
    %c0_i32_0 = arith.constant 0 : i32
    %c0_i32_1 = arith.constant 0 : i32
    return %c0_i32, %c0_i32_0 : i32, i32
  }
  func.func @transform_2(%arg0: i32) -> (i32, i32) {
    %c0_i32 = arith.constant 0 : i32
    %c0_i32_0 = arith.constant 0 : i32
    %c0_i32_1 = arith.constant 0 : i32
    return %c0_i32, %c0_i32_0 : i32, i32
  }
  func.func @transform_3(%arg0: i32) -> (i32, i32) {
    %c0_i32 = arith.constant 0 : i32
    %c0_i32_0 = arith.constant 0 : i32
    %c0_i32_1 = arith.constant 0 : i32
    return %c0_i32, %c0_i32_0 : i32, i32
  }
  func.func @transform_4(%arg0: i32) -> (i32, i32) {
    %c0_i32 = arith.constant 0 : i32
    %c0_i32_0 = arith.constant 0 : i32
    %c0_i32_1 = arith.constant 0 : i32
    return %c0_i32, %c0_i32_0 : i32, i32
  }
  func.func @transform_5(%arg0: i32) -> (i32, i32) {
    %c0_i32 = arith.constant 0 : i32
    %c0_i32_0 = arith.constant 0 : i32
    %c0_i32_1 = arith.constant 0 : i32
    return %c0_i32, %c0_i32_0 : i32, i32
  }
  func.func @transform_6(%arg0: i32) -> (i32, i32) {
    %c0_i32 = arith.constant 0 : i32
    %c0_i32_0 = arith.constant 0 : i32
    return %arg0, %c0_i32 : i32, i32
  }
}

</mosaic_0001>

<llo_original>
// kernel: tpu_custom_call.1
$region0: #{tpu_custom_call.1}
  #allocation0 [shape = 'u32[]', space=smem, size = 0x4, offset = 0x4, fixed_abs, tag = 'smem constant byte address 0x4 - core index']
  #allocation1 [shape = 'u32[144,128]{1,0:T(1,128)}', space=vmem, size = 0x12000, scoped, tag = 'internal scratch']
  %s0 = inlined_call_operand.hbm [shape: f32[16,32], index: 0, kind: input, shape index: {}]
  %s1 = inlined_call_operand.hbm [shape: f32[8,128], index: 1, kind: input, shape index: {}]
  %s2 = inlined_call_operand.vmem [shape: f32[32,96], index: 2, kind: input, shape index: {}]
  %s3 = inlined_call_operand.vmem [shape: f32[32,32], index: 3, kind: input, shape index: {}]
  %s4 = inlined_call_operand.vmem [shape: f32[32,64], index: 4, kind: input, shape index: {}]
  %s5 = inlined_call_operand.vmem [shape: f32[64,32], index: 5, kind: input, shape index: {}]
  %s6 = inlined_call_operand.hbm [shape: f32[16,32], index: 6, kind: output, shape index: {}]
  %s7 = sld [smem:[#allocation0]]
  $region42: #{tpu_custom_call.1} parent=0
    _
  %s9 = ssub.s32 1, %s7
  %s10 = scalar_select 0, %s9, %s7
  $region1: #{tpu_custom_call.1} parent=0
    #allocation2 [shape = 'u8[8192]{0}', space=vmem, size = 0x2000, scoped, tag = 'input window, operand 0, single buffered']
    #allocation3 [shape = 's32[1]{0}', space=sflag, size = 0x4, scoped, tag = 'scoped memory for tpu_custom_call.1']
    #allocation4 [shape = 's32[1]{0}', space=sflag, size = 0x4, scoped, tag = 'scoped memory for tpu_custom_call.1']
    #allocation5 [shape = 'u8[4096]{0}', space=vmem, size = 0x1000, scoped, tag = 'input window, operand 1, single buffered']
    #allocation6 [shape = 's32[1]{0}', space=sflag, size = 0x4, scoped, tag = 'scoped memory for tpu_custom_call.1']
    #allocation7 [shape = 'u8[8192]{0}', space=vmem, size = 0x2000, scoped, tag = 'output window, operand 0, single buffered']
    %11 = vsyncpa [#allocation3], 0
    %12 = vsyncpa [#allocation6], 0
    %13 = vsyncpa [#allocation4], 0
    // Predicated region
    $region2: #{tpu_custom_call.1} parent=1 // pred_check
      _
    $region3: #{tpu_custom_call.1} parent=1 // pred_check_branch
      %15 = sbr.rel (0) target = $region5
    $region4: #{tpu_custom_call.1} parent=1 // pred_region
      %s17 = ssub.s32 256, 256
      %18 = vsyncadd [#allocation3], %s17
      %s19 = sshll.u32 [#allocation2], 4
      %s20 = int_to_ptr.vmem [resolvable:$true] %s19
      %25 = dma.hbm_to_vmem [thread:$0]  %s0, 256, %s20, [#allocation3], 128, 128, 8
    $region5: #{tpu_custom_call.1} parent=1 // pred_fallthru
      _
    // Predicated region
    $region6: #{tpu_custom_call.1} parent=1 // pred_check
      _
    $region7: #{tpu_custom_call.1} parent=1 // pred_check_branch
      %27 = sbr.rel (0) target = $region9
    $region8: #{tpu_custom_call.1} parent=1 // pred_region
      %s29 = ssub.s32 128, 128
      %30 = vsyncadd [#allocation6], %s29
      %s32 = sshll.u32 [#allocation5], 4
      %s33 = int_to_ptr.vmem [resolvable:$true] %s32
      %35 = dma.hbm_to_vmem [thread:$0]  %s1, 128, %s33, [#allocation6]
    $region9: #{tpu_custom_call.1} parent=1 // pred_fallthru
      _
    // Predicated region
    $region10: #{tpu_custom_call.1} parent=1 // pred_check
      _
    $region11: #{tpu_custom_call.1} parent=1 // pred_check_branch
      %37 = sbr.rel (0) target = $region13
    $region12: #{tpu_custom_call.1} parent=1 // pred_region
      _
    $region13: #{tpu_custom_call.1} parent=1 // pred_fallthru
      _
    // Predicated region
    $region14: #{tpu_custom_call.1} parent=1 // pred_check
      _
    $region15: #{tpu_custom_call.1} parent=1 // pred_check_branch
      %39 = sbr.rel (0) target = $region17
    $region16: #{tpu_custom_call.1} parent=1 // pred_region
      _
    $region17: #{tpu_custom_call.1} parent=1 // pred_fallthru
      _
    // Predicated region
    $region18: #{tpu_custom_call.1} parent=1 // pred_check
      _
    $region19: #{tpu_custom_call.1} parent=1 // pred_check_branch
      %41 = sbr.rel (0) target = $region21
    $region20: #{tpu_custom_call.1} parent=1 // pred_region
      _
    $region21: #{tpu_custom_call.1} parent=1 // pred_fallthru
      _
    // Predicated region
    $region22: #{tpu_custom_call.1} parent=1 // pred_check
      _
    $region23: #{tpu_custom_call.1} parent=1 // pred_check_branch
      %43 = sbr.rel (0) target = $region25
    $region24: #{tpu_custom_call.1} parent=1 // pred_region
      _
    $region25: #{tpu_custom_call.1} parent=1 // pred_fallthru
      _
    // Predicated region
    $region26: #{tpu_custom_call.1} parent=1 // pred_check
      _
    $region27: #{tpu_custom_call.1} parent=1 // pred_check_branch
      %45 = sbr.rel (0) target = $region29
    $region28: #{tpu_custom_call.1} parent=1 // pred_region
      %46 = dma.done [#allocation3], 256
    $region29: #{tpu_custom_call.1} parent=1 // pred_fallthru
      _
    // Predicated region
    $region30: #{tpu_custom_call.1} parent=1 // pred_check
      _
    $region31: #{tpu_custom_call.1} parent=1 // pred_check_branch
      %48 = sbr.rel (0) target = $region33
    $region32: #{tpu_custom_call.1} parent=1 // pred_region
      %49 = dma.done [#allocation6], 128
    $region33: #{tpu_custom_call.1} parent=1 // pred_fallthru
      _
    %v50 = vld [vmem:[#allocation2] sm:$0xff]
    %v51 = vld [vmem:[#allocation2 + $0x8] sm:$0xff]
    %v52 = vld [vmem:[#allocation5] sm:$0xff]
    %vm53 = vcmask 261120
    %v54 = vsel %vm53, %v50, 0.0
    %55 = vadd.xlane.f32.xlu0 %v54
    %v56 = vpop.xlane.xlu0 %55
    %v57 = vsel %vm53, %v51, 0.0
    %58 = vadd.xlane.f32.xlu0 %v57
    %v59 = vpop.xlane.xlu0 %58
    %v60 = vrcp.pop 32.0
    %v61 = vmul.f32 %v56, %v60
    %v62 = vmul.f32 %v59, %v60
    %v63 = vsub.f32 %v50, %v61
    %v64 = vsub.f32 %v51, %v62
    %v65 = vmul.f32 %v63, %v63
    %v66 = vmul.f32 %v64, %v64
    %v67 = vsel %vm53, %v65, 0.0
    %68 = vadd.xlane.f32.xlu0 %v67
    %v69 = vpop.xlane.xlu0 %68
    %v70 = vsel %vm53, %v66, 0.0
    %71 = vadd.xlane.f32.xlu0 %v70
    %v72 = vpop.xlane.xlu0 %71
    %v73 = vmul.f32 %v69, %v60
    %v74 = vmul.f32 %v72, %v60
    %v75 = vadd.f32 %v73, 1e-05
    %v76 = vadd.f32 %v74, 1e-05
    %v77 = vrsqrt.pop %v75
    %v78 = vrsqrt.pop %v76
    %v79 = vmul.f32 %v63, %v77
    %v80 = vmul.f32 %v64, %v78
    %v81 = vld [vmem:[%s2] sm:$0xff]
    %v82 = vld [vmem:[%s2 + $0x8] sm:$0xff]
    %v83 = vld [vmem:[%s2 + $0x10] sm:$0xff]
    %v84 = vld [vmem:[%s2 + $0x18] sm:$0xff]
    %v85 = vlaneseq
    %v86 = vshrl.u32 %v85, 7
    %v87 = vsub.s32 0, %v86
    %v88 = vrot.slane %v52, %v87
    %v90 = vsel %vm53, %v79, 0
    %v93 = vsel %vm53, %v80, 0
    %95 = vmatprep.subr.mxu0 0.0
    %96 = vmatpush1.msra.mxu0 0.0
    %97 = vmatprep.subr.mxu0 0.0
    %98 = vmatpush1.msra.mxu0 0.0
    %99 = vmatprep.subr.mxu0 0.0
    %100 = vmatpush1.msra.mxu0 0.0
    %101 = vmatprep.subr.mxu0 0.0
    %102 = vmatpush1.msra.mxu0 0.0
    %103 = vmatprep.subr.mxu0 0.0
    %104 = vmatpush1.msra.mxu0 0.0
    %105 = vmatprep.subr.mxu0 0.0
    %106 = vmatpush1.msra.mxu0 0.0
    %107 = vmatprep.subr.mxu0 0.0
    %108 = vmatpush1.msra.mxu0 0.0
    %109 = vmatprep.subr.mxu0 0.0
    %110 = vmatpush1.msra.mxu0 0.0
    %111 = vmatprep.subr.mxu0 0.0
    %112 = vmatpush1.msra.mxu0 0.0
    %113 = vmatprep.subr.mxu0 0.0
    %114 = vmatpush1.msra.mxu0 0.0
    %115 = vmatprep.subr.mxu0 0.0
    %116 = vmatpush1.msra.mxu0 0.0
    %117 = vmatprep.subr.mxu0 0.0
    %118 = vmatpush1.msra.mxu0 0.0
    %119 = vmatprep.subr.mxu0 0.0
    %120 = vmatpush1.msra.mxu0 %v84
    %121 = vmatprep.subr.mxu0 0.0
    %122 = vmatpush1.msra.mxu0 %v83
    %123 = vmatprep.subr.mxu0 0.0
    %124 = vmatpush1.msra.mxu0 %v82
    %125 = vmatprep.subr.mxu0 0.0
    %126 = vmatpush1.msra.mxu0 %v81
    %127 = vmatprep.subr.mxu0 0.0
    %128 = vmatpush2.msra.mxu0 0.0
    %129 = vmatprep.subr.mxu0 0.0
    %130 = vmatpush2.msra.mxu0 0.0
    %131 = vmatprep.subr.mxu0 0.0
    %132 = vmatpush2.msra.mxu0 0.0
    %133 = vmatprep.subr.mxu0 0.0
    %134 = vmatpush2.msra.mxu0 0.0
    %135 = vmatprep.subr.mxu0 0.0
    %136 = vmatpush2.msra.mxu0 0.0
    %137 = vmatprep.subr.mxu0 0.0
    %138 = vmatpush2.msra.mxu0 0.0
    %139 = vmatprep.subr.mxu0 0.0
    %140 = vmatpush2.msra.mxu0 0.0
    %141 = vmatprep.subr.mxu0 0.0
    %142 = vmatpush2.msra.mxu0 0.0
    %143 = vmatprep.subr.mxu0 0.0
    %144 = vmatpush2.msra.mxu0 0.0
    %145 = vmatprep.subr.mxu0 0.0
    %146 = vmatpush2.msra.mxu0 0.0
    %147 = vmatprep.subr.mxu0 0.0
    %148 = vmatpush2.msra.mxu0 0.0
    %149 = vmatprep.subr.mxu0 0.0
    %150 = vmatpush2.msra.mxu0 0.0
    %151 = vmatprep.subr.mxu0 0.0
    %152 = vmatpush2.msra.mxu0 0.0
    %153 = vmatprep.subr.mxu0 0.0
    %154 = vmatpush2.msra.mxu0 0.0
    %155 = vmatprep.subr.mxu0 0.0
    %156 = vmatpush2.msra.mxu0 0.0
    %157 = vmatprep.subr.mxu0 0.0
    %158 = vmatpush2.msra.mxu0 0.0
    %159 = vmatprep.mubr.f32.mxu0 0.0
    %160 = vmatmul.mubr.f32.gmra.mxu0 %v90
    %v161 = vpop.f32.mrf.mxu0
    %v162 = vadd.f32 %v88, %v161
    %v163 = vpop.f32.mrf.mxu0
    %164 = vmatprep.mubr.f32.mxu0 0.0
    %165 = vmatmul.mubr.f32.gmra.mxu0 %v93
    %v166 = vpop.f32.mrf.mxu0
    %v167 = vadd.f32 %v88, %v166
    %v168 = vpop.f32.mrf.mxu0
    %169 = vdwg.mxu0
    %172 = vrot.lane.b32.xlu0 %v162, 120
    %v173 = vpop.permute.xlu0 %172
    %174 = vrot.lane.b32.xlu0 %v167, 120
    %v175 = vpop.permute.xlu0 %174
    %176 = vrot.lane.b32.xlu0 %v162, 112
    %v177 = vpop.permute.xlu0 %176
    %178 = vrot.lane.b32.xlu0 %v167, 112
    %v179 = vpop.permute.xlu0 %178
    %180 = vrot.lane.b32.xlu0 %v162, 104
    %v181 = vpop.permute.xlu0 %180
    %182 = vrot.lane.b32.xlu0 %v167, 104
    %v183 = vpop.permute.xlu0 %182
    %184 = vrot.lane.b32.xlu0 %v162, 96
    %v185 = vpop.permute.xlu0 %184
    %vm186 = vcmask 64512
    %v187 = vsel %vm186, %v162, 0
    %v189 = vsel %vm186, %v185, 0
    %191 = vmatprep.subr.mxu0 0.0
    %192 = vmatpush1.xpose.msra.mxu0 0.0
    %193 = vmatprep.subr.mxu0 0.0
    %194 = vmatpush1.xpose.msra.mxu0 0.0
    %195 = vmatprep.subr.mxu0 0.0
    %196 = vmatpush1.xpose.msra.mxu0 0.0
    %197 = vmatprep.subr.mxu0 0.0
    %198 = vmatpush1.xpose.msra.mxu0 0.0
    %199 = vmatprep.subr.mxu0 0.0
    %200 = vmatpush1.xpose.msra.mxu0 0.0
    %201 = vmatprep.subr.mxu0 0.0
    %202 = vmatpush1.xpose.msra.mxu0 0.0
    %203 = vmatprep.subr.mxu0 0.0
    %204 = vmatpush1.xpose.msra.mxu0 0.0
    %205 = vmatprep.subr.mxu0 0.0
    %206 = vmatpush1.xpose.msra.mxu0 0.0
    %207 = vmatprep.subr.mxu0 0.0
    %208 = vmatpush1.xpose.msra.mxu0 0.0
    %209 = vmatprep.subr.mxu0 0.0
    %210 = vmatpush1.xpose.msra.mxu0 0.0
    %211 = vmatprep.subr.mxu0 0.0
    %212 = vmatpush1.xpose.msra.mxu0 0.0
    %213 = vmatprep.subr.mxu0 0.0
    %214 = vmatpush1.xpose.msra.mxu0 0.0
    %215 = vmatprep.subr.mxu0 0.0
    %216 = vmatpush1.xpose.msra.mxu0 0.0
    %217 = vmatprep.subr.mxu0 0.0
    %218 = vmatpush1.xpose.msra.mxu0 0.0
    %219 = vmatprep.subr.mxu0 0.0
    %220 = vmatpush1.xpose.msra.mxu0 0.0
    %221 = vmatprep.subr.mxu0 0.0
    %222 = vmatpush1.xpose.msra.mxu0 %v189
    %223 = vmatprep.subr.mxu0 0.0
    %224 = vmatpush2.xpose.msra.mxu0 0.0
    %225 = vmatprep.subr.mxu0 0.0
    %226 = vmatpush2.xpose.msra.mxu0 0.0
    %227 = vmatprep.subr.mxu0 0.0
    %228 = vmatpush2.xpose.msra.mxu0 0.0
    %229 = vmatprep.subr.mxu0 0.0
    %230 = vmatpush2.xpose.msra.mxu0 0.0
    %231 = vmatprep.subr.mxu0 0.0
    %232 = vmatpush2.xpose.msra.mxu0 0.0
    %233 = vmatprep.subr.mxu0 0.0
    %234 = vmatpush2.xpose.msra.mxu0 0.0
    %235 = vmatprep.subr.mxu0 0.0
    %236 = vmatpush2.xpose.msra.mxu0 0.0
    %237 = vmatprep.subr.mxu0 0.0
    %238 = vmatpush2.xpose.msra.mxu0 0.0
    %239 = vmatprep.subr.mxu0 0.0
    %240 = vmatpush2.xpose.msra.mxu0 0.0
    %241 = vmatprep.subr.mxu0 0.0
    %242 = vmatpush2.xpose.msra.mxu0 0.0
    %243 = vmatprep.subr.mxu0 0.0
    %244 = vmatpush2.xpose.msra.mxu0 0.0
    %245 = vmatprep.subr.mxu0 0.0
    %246 = vmatpush2.xpose.msra.mxu0 0.0
    %247 = vmatprep.subr.mxu0 0.0
    %248 = vmatpush2.xpose.msra.mxu0 0.0
    %249 = vmatprep.subr.mxu0 0.0
    %250 = vmatpush2.xpose.msra.mxu0 0.0
    %251 = vmatprep.subr.mxu0 0.0
    %252 = vmatpush2.xpose.msra.mxu0 0.0
    %253 = vmatprep.subr.mxu0 0.0
    %254 = vmatpush2.xpose.msra.mxu0 0.0
    %255 = vmatprep.mubr.f32.mxu0 0.0
    %256 = vmatmul.mubr.f32.gmra.mxu0 %v187
    %v257 = vpop.f32.mrf.mxu0
    %v258 = vadd.f32 0.0, %v257
    %v259 = vpop.f32.mrf.mxu0
    %260 = vdwg.mxu0
    %261 = vrot.lane.b32.xlu0 %v167, 96
    %v262 = vpop.permute.xlu0 %261
    %v263 = vsel %vm186, %v167, 0
    %v265 = vsel %vm186, %v262, 0
    %267 = vmatprep.subr.mxu0 0.0
    %268 = vmatpush1.xpose.msra.mxu0 0.0
    %269 = vmatprep.subr.mxu0 0.0
    %270 = vmatpush1.xpose.msra.mxu0 0.0
    %271 = vmatprep.subr.mxu0 0.0
    %272 = vmatpush1.xpose.msra.mxu0 0.0
    %273 = vmatprep.subr.mxu0 0.0
    %274 = vmatpush1.xpose.msra.mxu0 0.0
    %275 = vmatprep.subr.mxu0 0.0
    %276 = vmatpush1.xpose.msra.mxu0 0.0
    %277 = vmatprep.subr.mxu0 0.0
    %278 = vmatpush1.xpose.msra.mxu0 0.0
    %279 = vmatprep.subr.mxu0 0.0
    %280 = vmatpush1.xpose.msra.mxu0 0.0
    %281 = vmatprep.subr.mxu0 0.0
    %282 = vmatpush1.xpose.msra.mxu0 0.0
    %283 = vmatprep.subr.mxu0 0.0
    %284 = vmatpush1.xpose.msra.mxu0 0.0
    %285 = vmatprep.subr.mxu0 0.0
    %286 = vmatpush1.xpose.msra.mxu0 0.0
    %287 = vmatprep.subr.mxu0 0.0
    %288 = vmatpush1.xpose.msra.mxu0 0.0
    %289 = vmatprep.subr.mxu0 0.0
    %290 = vmatpush1.xpose.msra.mxu0 0.0
    %291 = vmatprep.subr.mxu0 0.0
    %292 = vmatpush1.xpose.msra.mxu0 0.0
    %293 = vmatprep.subr.mxu0 0.0
    %294 = vmatpush1.xpose.msra.mxu0 0.0
    %295 = vmatprep.subr.mxu0 0.0
    %296 = vmatpush1.xpose.msra.mxu0 0.0
    %297 = vmatprep.subr.mxu0 0.0
    %298 = vmatpush1.xpose.msra.mxu0 %v265
    %299 = vmatprep.subr.mxu0 0.0
    %300 = vmatpush2.xpose.msra.mxu0 0.0
    %301 = vmatprep.subr.mxu0 0.0
    %302 = vmatpush2.xpose.msra.mxu0 0.0
    %303 = vmatprep.subr.mxu0 0.0
    %304 = vmatpush2.xpose.msra.mxu0 0.0
    %305 = vmatprep.subr.mxu0 0.0
    %306 = vmatpush2.xpose.msra.mxu0 0.0
    %307 = vmatprep.subr.mxu0 0.0
    %308 = vmatpush2.xpose.msra.mxu0 0.0
    %309 = vmatprep.subr.mxu0 0.0
    %310 = vmatpush2.xpose.msra.mxu0 0.0
    %311 = vmatprep.subr.mxu0 0.0
    %312 = vmatpush2.xpose.msra.mxu0 0.0
    %313 = vmatprep.subr.mxu0 0.0
    %314 = vmatpush2.xpose.msra.mxu0 0.0
    %315 = vmatprep.subr.mxu0 0.0
    %316 = vmatpush2.xpose.msra.mxu0 0.0
    %317 = vmatprep.subr.mxu0 0.0
    %318 = vmatpush2.xpose.msra.mxu0 0.0
    %319 = vmatprep.subr.mxu0 0.0
    %320 = vmatpush2.xpose.msra.mxu0 0.0
    %321 = vmatprep.subr.mxu0 0.0
    %322 = vmatpush2.xpose.msra.mxu0 0.0
    %323 = vmatprep.subr.mxu0 0.0
    %324 = vmatpush2.xpose.msra.mxu0 0.0
    %325 = vmatprep.subr.mxu0 0.0
    %326 = vmatpush2.xpose.msra.mxu0 0.0
    %327 = vmatprep.subr.mxu0 0.0
    %328 = vmatpush2.xpose.msra.mxu0 0.0
    %329 = vmatprep.subr.mxu0 0.0
    %330 = vmatpush2.xpose.msra.mxu0 0.0
    %331 = vmatprep.mubr.f32.mxu0 0.0
    %332 = vmatmul.mubr.f32.gmra.mxu0 %v263
    %v333 = vpop.f32.mrf.mxu0
    %v334 = vadd.f32 0.0, %v333
    %v335 = vpop.f32.mrf.mxu0
    %336 = vdwg.mxu0
    %337 = vrot.lane.b32.xlu0 %v173, 96
    %v338 = vpop.permute.xlu0 %337
    %v339 = vsel %vm186, %v173, 0
    %v341 = vsel %vm186, %v338, 0
    %343 = vmatprep.subr.mxu0 0.0
    %344 = vmatpush1.xpose.msra.mxu0 0.0
    %345 = vmatprep.subr.mxu0 0.0
    %346 = vmatpush1.xpose.msra.mxu0 0.0
    %347 = vmatprep.subr.mxu0 0.0
    %348 = vmatpush1.xpose.msra.mxu0 0.0
    %349 = vmatprep.subr.mxu0 0.0
    %350 = vmatpush1.xpose.msra.mxu0 0.0
    %351 = vmatprep.subr.mxu0 0.0
    %352 = vmatpush1.xpose.msra.mxu0 0.0
    %353 = vmatprep.subr.mxu0 0.0
    %354 = vmatpush1.xpose.msra.mxu0 0.0
    %355 = vmatprep.subr.mxu0 0.0
    %356 = vmatpush1.xpose.msra.mxu0 0.0
    %357 = vmatprep.subr.mxu0 0.0
    %358 = vmatpush1.xpose.msra.mxu0 0.0
    %359 = vmatprep.subr.mxu0 0.0
    %360 = vmatpush1.xpose.msra.mxu0 0.0
    %361 = vmatprep.subr.mxu0 0.0
    %362 = vmatpush1.xpose.msra.mxu0 0.0
    %363 = vmatprep.subr.mxu0 0.0
    %364 = vmatpush1.xpose.msra.mxu0 0.0
    %365 = vmatprep.subr.mxu0 0.0
    %366 = vmatpush1.xpose.msra.mxu0 0.0
    %367 = vmatprep.subr.mxu0 0.0
    %368 = vmatpush1.xpose.msra.mxu0 0.0
    %369 = vmatprep.subr.mxu0 0.0
    %370 = vmatpush1.xpose.msra.mxu0 0.0
    %371 = vmatprep.subr.mxu0 0.0
    %372 = vmatpush1.xpose.msra.mxu0 0.0
    %373 = vmatprep.subr.mxu0 0.0
    %374 = vmatpush1.xpose.msra.mxu0 %v341
    %375 = vmatprep.subr.mxu0 0.0
    %376 = vmatpush2.xpose.msra.mxu0 0.0
    %377 = vmatprep.subr.mxu0 0.0
    %378 = vmatpush2.xpose.msra.mxu0 0.0
    %379 = vmatprep.subr.mxu0 0.0
    %380 = vmatpush2.xpose.msra.mxu0 0.0
    %381 = vmatprep.subr.mxu0 0.0
    %382 = vmatpush2.xpose.msra.mxu0 0.0
    %383 = vmatprep.subr.mxu0 0.0
    %384 = vmatpush2.xpose.msra.mxu0 0.0
    %385 = vmatprep.subr.mxu0 0.0
    %386 = vmatpush2.xpose.msra.mxu0 0.0
    %387 = vmatprep.subr.mxu0 0.0
    %388 = vmatpush2.xpose.msra.mxu0 0.0
    %389 = vmatprep.subr.mxu0 0.0
    %390 = vmatpush2.xpose.msra.mxu0 0.0
    %391 = vmatprep.subr.mxu0 0.0
    %392 = vmatpush2.xpose.msra.mxu0 0.0
    %393 = vmatprep.subr.mxu0 0.0
    %394 = vmatpush2.xpose.msra.mxu0 0.0
    %395 = vmatprep.subr.mxu0 0.0
    %396 = vmatpush2.xpose.msra.mxu0 0.0
    %397 = vmatprep.subr.mxu0 0.0
    %398 = vmatpush2.xpose.msra.mxu0 0.0
    %399 = vmatprep.subr.mxu0 0.0
    %400 = vmatpush2.xpose.msra.mxu0 0.0
    %401 = vmatprep.subr.mxu0 0.0
    %402 = vmatpush2.xpose.msra.mxu0 0.0
    %403 = vmatprep.subr.mxu0 0.0
    %404 = vmatpush2.xpose.msra.mxu0 0.0
    %405 = vmatprep.subr.mxu0 0.0
    %406 = vmatpush2.xpose.msra.mxu0 0.0
    %407 = vmatprep.mubr.f32.mxu0 0.0
    %408 = vmatmul.mubr.f32.gmra.mxu0 %v339
    %v409 = vpop.f32.mrf.mxu0
    %v410 = vadd.f32 0.0, %v409
    %v411 = vpop.f32.mrf.mxu0
    %412 = vdwg.mxu0
    %413 = vrot.lane.b32.xlu0 %v175, 96
    %v414 = vpop.permute.xlu0 %413
    %v415 = vsel %vm186, %v175, 0
    %v417 = vsel %vm186, %v414, 0
    %419 = vmatprep.subr.mxu0 0.0
    %420 = vmatpush1.xpose.msra.mxu0 0.0
    %421 = vmatprep.subr.mxu0 0.0
    %422 = vmatpush1.xpose.msra.mxu0 0.0
    %423 = vmatprep.subr.mxu0 0.0
    %424 = vmatpush1.xpose.msra.mxu0 0.0
    %425 = vmatprep.subr.mxu0 0.0
    %426 = vmatpush1.xpose.msra.mxu0 0.0
    %427 = vmatprep.subr.mxu0 0.0
    %428 = vmatpush1.xpose.msra.mxu0 0.0
    %429 = vmatprep.subr.mxu0 0.0
    %430 = vmatpush1.xpose.msra.mxu0 0.0
    %431 = vmatprep.subr.mxu0 0.0
    %432 = vmatpush1.xpose.msra.mxu0 0.0
    %433 = vmatprep.subr.mxu0 0.0
    %434 = vmatpush1.xpose.msra.mxu0 0.0
    %435 = vmatprep.subr.mxu0 0.0
    %436 = vmatpush1.xpose.msra.mxu0 0.0
    %437 = vmatprep.subr.mxu0 0.0
    %438 = vmatpush1.xpose.msra.mxu0 0.0
    %439 = vmatprep.subr.mxu0 0.0
    %440 = vmatpush1.xpose.msra.mxu0 0.0
    %441 = vmatprep.subr.mxu0 0.0
    %442 = vmatpush1.xpose.msra.mxu0 0.0
    %443 = vmatprep.subr.mxu0 0.0
    %444 = vmatpush1.xpose.msra.mxu0 0.0
    %445 = vmatprep.subr.mxu0 0.0
    %446 = vmatpush1.xpose.msra.mxu0 0.0
    %447 = vmatprep.subr.mxu0 0.0
    %448 = vmatpush1.xpose.msra.mxu0 0.0
    %449 = vmatprep.subr.mxu0 0.0
    %450 = vmatpush1.xpose.msra.mxu0 %v417
    %451 = vmatprep.subr.mxu0 0.0
    %452 = vmatpush2.xpose.msra.mxu0 0.0
    %453 = vmatprep.subr.mxu0 0.0
    %454 = vmatpush2.xpose.msra.mxu0 0.0
    %455 = vmatprep.subr.mxu0 0.0
    %456 = vmatpush2.xpose.msra.mxu0 0.0
    %457 = vmatprep.subr.mxu0 0.0
    %458 = vmatpush2.xpose.msra.mxu0 0.0
    %459 = vmatprep.subr.mxu0 0.0
    %460 = vmatpush2.xpose.msra.mxu0 0.0
    %461 = vmatprep.subr.mxu0 0.0
    %462 = vmatpush2.xpose.msra.mxu0 0.0
    %463 = vmatprep.subr.mxu0 0.0
    %464 = vmatpush2.xpose.msra.mxu0 0.0
    %465 = vmatprep.subr.mxu0 0.0
    %466 = vmatpush2.xpose.msra.mxu0 0.0
    %467 = vmatprep.subr.mxu0 0.0
    %468 = vmatpush2.xpose.msra.mxu0 0.0
    %469 = vmatprep.subr.mxu0 0.0
    %470 = vmatpush2.xpose.msra.mxu0 0.0
    %471 = vmatprep.subr.mxu0 0.0
    %472 = vmatpush2.xpose.msra.mxu0 0.0
    %473 = vmatprep.subr.mxu0 0.0
    %474 = vmatpush2.xpose.msra.mxu0 0.0
    %475 = vmatprep.subr.mxu0 0.0
    %476 = vmatpush2.xpose.msra.mxu0 0.0
    %477 = vmatprep.subr.mxu0 0.0
    %478 = vmatpush2.xpose.msra.mxu0 0.0
    %479 = vmatprep.subr.mxu0 0.0
    %480 = vmatpush2.xpose.msra.mxu0 0.0
    %481 = vmatprep.subr.mxu0 0.0
    %482 = vmatpush2.xpose.msra.mxu0 0.0
    %483 = vmatprep.mubr.f32.mxu0 0.0
    %484 = vmatmul.mubr.f32.gmra.mxu0 %v415
    %v485 = vpop.f32.mrf.mxu0
    %v486 = vadd.f32 0.0, %v485
    %v487 = vpop.f32.mrf.mxu0
    %488 = vdwg.mxu0
    %489 = vrot.lane.b32.xlu0 %v177, 96
    %v490 = vpop.permute.xlu0 %489
    %v491 = vsel %vm186, %v177, 0
    %v493 = vsel %vm186, %v490, 0
    %495 = vmatprep.subr.mxu0 0.0
    %496 = vmatpush1.xpose.msra.mxu0 0.0
    %497 = vmatprep.subr.mxu0 0.0
    %498 = vmatpush1.xpose.msra.mxu0 0.0
    %499 = vmatprep.subr.mxu0 0.0
    %500 = vmatpush1.xpose.msra.mxu0 0.0
    %501 = vmatprep.subr.mxu0 0.0
    %502 = vmatpush1.xpose.msra.mxu0 0.0
    %503 = vmatprep.subr.mxu0 0.0
    %504 = vmatpush1.xpose.msra.mxu0 0.0
    %505 = vmatprep.subr.mxu0 0.0
    %506 = vmatpush1.xpose.msra.mxu0 0.0
    %507 = vmatprep.subr.mxu0 0.0
    %508 = vmatpush1.xpose.msra.mxu0 0.0
    %509 = vmatprep.subr.mxu0 0.0
    %510 = vmatpush1.xpose.msra.mxu0 0.0
    %511 = vmatprep.subr.mxu0 0.0
    %512 = vmatpush1.xpose.msra.mxu0 0.0
    %513 = vmatprep.subr.mxu0 0.0
    %514 = vmatpush1.xpose.msra.mxu0 0.0
    %515 = vmatprep.subr.mxu0 0.0
    %516 = vmatpush1.xpose.msra.mxu0 0.0
    %517 = vmatprep.subr.mxu0 0.0
    %518 = vmatpush1.xpose.msra.mxu0 0.0
    %519 = vmatprep.subr.mxu0 0.0
    %520 = vmatpush1.xpose.msra.mxu0 0.0
    %521 = vmatprep.subr.mxu0 0.0
    %522 = vmatpush1.xpose.msra.mxu0 0.0
    %523 = vmatprep.subr.mxu0 0.0
    %524 = vmatpush1.xpose.msra.mxu0 0.0
    %525 = vmatprep.subr.mxu0 0.0
    %526 = vmatpush1.xpose.msra.mxu0 %v493
    %527 = vmatprep.subr.mxu0 0.0
    %528 = vmatpush2.xpose.msra.mxu0 0.0
    %529 = vmatprep.subr.mxu0 0.0
    %530 = vmatpush2.xpose.msra.mxu0 0.0
    %531 = vmatprep.subr.mxu0 0.0
    %532 = vmatpush2.xpose.msra.mxu0 0.0
    %533 = vmatprep.subr.mxu0 0.0
    %534 = vmatpush2.xpose.msra.mxu0 0.0
    %535 = vmatprep.subr.mxu0 0.0
    %536 = vmatpush2.xpose.msra.mxu0 0.0
    %537 = vmatprep.subr.mxu0 0.0
    %538 = vmatpush2.xpose.msra.mxu0 0.0
    %539 = vmatprep.subr.mxu0 0.0
    %540 = vmatpush2.xpose.msra.mxu0 0.0
    %541 = vmatprep.subr.mxu0 0.0
    %542 = vmatpush2.xpose.msra.mxu0 0.0
    %543 = vmatprep.subr.mxu0 0.0
    %544 = vmatpush2.xpose.msra.mxu0 0.0
    %545 = vmatprep.subr.mxu0 0.0
    %546 = vmatpush2.xpose.msra.mxu0 0.0
    %547 = vmatprep.subr.mxu0 0.0
    %548 = vmatpush2.xpose.msra.mxu0 0.0
    %549 = vmatprep.subr.mxu0 0.0
    %550 = vmatpush2.xpose.msra.mxu0 0.0
    %551 = vmatprep.subr.mxu0 0.0
    %552 = vmatpush2.xpose.msra.mxu0 0.0
    %553 = vmatprep.subr.mxu0 0.0
    %554 = vmatpush2.xpose.msra.mxu0 0.0
    %555 = vmatprep.subr.mxu0 0.0
    %556 = vmatpush2.xpose.msra.mxu0 0.0
    %557 = vmatprep.subr.mxu0 0.0
    %558 = vmatpush2.xpose.msra.mxu0 0.0
    %559 = vmatprep.mubr.f32.mxu0 0.0
    %560 = vmatmul.mubr.f32.gmra.mxu0 %v491
    %v561 = vpop.f32.mrf.mxu0
    %v562 = vadd.f32 0.0, %v561
    %v563 = vpop.f32.mrf.mxu0
    %564 = vdwg.mxu0
    %565 = vrot.lane.b32.xlu0 %v179, 96
    %v566 = vpop.permute.xlu0 %565
    %v567 = vsel %vm186, %v179, 0
    %v569 = vsel %vm186, %v566, 0
    %571 = vmatprep.subr.mxu0 0.0
    %572 = vmatpush1.xpose.msra.mxu0 0.0
    %573 = vmatprep.subr.mxu0 0.0
    %574 = vmatpush1.xpose.msra.mxu0 0.0
    %575 = vmatprep.subr.mxu0 0.0
    %576 = vmatpush1.xpose.msra.mxu0 0.0
    %577 = vmatprep.subr.mxu0 0.0
    %578 = vmatpush1.xpose.msra.mxu0 0.0
    %579 = vmatprep.subr.mxu0 0.0
    %580 = vmatpush1.xpose.msra.mxu0 0.0
    %581 = vmatprep.subr.mxu0 0.0
    %582 = vmatpush1.xpose.msra.mxu0 0.0
    %583 = vmatprep.subr.mxu0 0.0
    %584 = vmatpush1.xpose.msra.mxu0 0.0
    %585 = vmatprep.subr.mxu0 0.0
    %586 = vmatpush1.xpose.msra.mxu0 0.0
    %587 = vmatprep.subr.mxu0 0.0
    %588 = vmatpush1.xpose.msra.mxu0 0.0
    %589 = vmatprep.subr.mxu0 0.0
    %590 = vmatpush1.xpose.msra.mxu0 0.0
    %591 = vmatprep.subr.mxu0 0.0
    %592 = vmatpush1.xpose.msra.mxu0 0.0
    %593 = vmatprep.subr.mxu0 0.0
    %594 = vmatpush1.xpose.msra.mxu0 0.0
    %595 = vmatprep.subr.mxu0 0.0
    %596 = vmatpush1.xpose.msra.mxu0 0.0
    %597 = vmatprep.subr.mxu0 0.0
    %598 = vmatpush1.xpose.msra.mxu0 0.0
    %599 = vmatprep.subr.mxu0 0.0
    %600 = vmatpush1.xpose.msra.mxu0 0.0
    %601 = vmatprep.subr.mxu0 0.0
    %602 = vmatpush1.xpose.msra.mxu0 %v569
    %603 = vmatprep.subr.mxu0 0.0
    %604 = vmatpush2.xpose.msra.mxu0 0.0
    %605 = vmatprep.subr.mxu0 0.0
    %606 = vmatpush2.xpose.msra.mxu0 0.0
    %607 = vmatprep.subr.mxu0 0.0
    %608 = vmatpush2.xpose.msra.mxu0 0.0
    %609 = vmatprep.subr.mxu0 0.0
    %610 = vmatpush2.xpose.msra.mxu0 0.0
    %611 = vmatprep.subr.mxu0 0.0
    %612 = vmatpush2.xpose.msra.mxu0 0.0
    %613 = vmatprep.subr.mxu0 0.0
    %614 = vmatpush2.xpose.msra.mxu0 0.0
    %615 = vmatprep.subr.mxu0 0.0
    %616 = vmatpush2.xpose.msra.mxu0 0.0
    %617 = vmatprep.subr.mxu0 0.0
    %618 = vmatpush2.xpose.msra.mxu0 0.0
    %619 = vmatprep.subr.mxu0 0.0
    %620 = vmatpush2.xpose.msra.mxu0 0.0
    %621 = vmatprep.subr.mxu0 0.0
    %622 = vmatpush2.xpose.msra.mxu0 0.0
    %623 = vmatprep.subr.mxu0 0.0
    %624 = vmatpush2.xpose.msra.mxu0 0.0
    %625 = vmatprep.subr.mxu0 0.0
    %626 = vmatpush2.xpose.msra.mxu0 0.0
    %627 = vmatprep.subr.mxu0 0.0
    %628 = vmatpush2.xpose.msra.mxu0 0.0
    %629 = vmatprep.subr.mxu0 0.0
    %630 = vmatpush2.xpose.msra.mxu0 0.0
    %631 = vmatprep.subr.mxu0 0.0
    %632 = vmatpush2.xpose.msra.mxu0 0.0
    %633 = vmatprep.subr.mxu0 0.0
    %634 = vmatpush2.xpose.msra.mxu0 0.0
    %635 = vmatprep.mubr.f32.mxu0 0.0
    %636 = vmatmul.mubr.f32.gmra.mxu0 %v567
    %v637 = vpop.f32.mrf.mxu0
    %v638 = vadd.f32 0.0, %v637
    %v639 = vpop.f32.mrf.mxu0
    %640 = vdwg.mxu0
    %641 = vrot.lane.b32.xlu0 %v181, 96
    %v642 = vpop.permute.xlu0 %641
    %v643 = vsel %vm186, %v181, 0
    %v645 = vsel %vm186, %v642, 0
    %647 = vmatprep.subr.mxu0 0.0
    %648 = vmatpush1.xpose.msra.mxu0 0.0
    %649 = vmatprep.subr.mxu0 0.0
    %650 = vmatpush1.xpose.msra.mxu0 0.0
    %651 = vmatprep.subr.mxu0 0.0
    %652 = vmatpush1.xpose.msra.mxu0 0.0
    %653 = vmatprep.subr.mxu0 0.0
    %654 = vmatpush1.xpose.msra.mxu0 0.0
    %655 = vmatprep.subr.mxu0 0.0
    %656 = vmatpush1.xpose.msra.mxu0 0.0
    %657 = vmatprep.subr.mxu0 0.0
    %658 = vmatpush1.xpose.msra.mxu0 0.0
    %659 = vmatprep.subr.mxu0 0.0
    %660 = vmatpush1.xpose.msra.mxu0 0.0
    %661 = vmatprep.subr.mxu0 0.0
    %662 = vmatpush1.xpose.msra.mxu0 0.0
    %663 = vmatprep.subr.mxu0 0.0
    %664 = vmatpush1.xpose.msra.mxu0 0.0
    %665 = vmatprep.subr.mxu0 0.0
    %666 = vmatpush1.xpose.msra.mxu0 0.0
    %667 = vmatprep.subr.mxu0 0.0
    %668 = vmatpush1.xpose.msra.mxu0 0.0
    %669 = vmatprep.subr.mxu0 0.0
    %670 = vmatpush1.xpose.msra.mxu0 0.0
    %671 = vmatprep.subr.mxu0 0.0
    %672 = vmatpush1.xpose.msra.mxu0 0.0
    %673 = vmatprep.subr.mxu0 0.0
    %674 = vmatpush1.xpose.msra.mxu0 0.0
    %675 = vmatprep.subr.mxu0 0.0
    %676 = vmatpush1.xpose.msra.mxu0 0.0
    %677 = vmatprep.subr.mxu0 0.0
    %678 = vmatpush1.xpose.msra.mxu0 %v645
    %679 = vmatprep.subr.mxu0 0.0
    %680 = vmatpush2.xpose.msra.mxu0 0.0
    %681 = vmatprep.subr.mxu0 0.0
    %682 = vmatpush2.xpose.msra.mxu0 0.0
    %683 = vmatprep.subr.mxu0 0.0
    %684 = vmatpush2.xpose.msra.mxu0 0.0
    %685 = vmatprep.subr.mxu0 0.0
    %686 = vmatpush2.xpose.msra.mxu0 0.0
    %687 = vmatprep.subr.mxu0 0.0
    %688 = vmatpush2.xpose.msra.mxu0 0.0
    %689 = vmatprep.subr.mxu0 0.0
    %690 = vmatpush2.xpose.msra.mxu0 0.0
    %691 = vmatprep.subr.mxu0 0.0
    %692 = vmatpush2.xpose.msra.mxu0 0.0
    %693 = vmatprep.subr.mxu0 0.0
    %694 = vmatpush2.xpose.msra.mxu0 0.0
    %695 = vmatprep.subr.mxu0 0.0
    %696 = vmatpush2.xpose.msra.mxu0 0.0
    %697 = vmatprep.subr.mxu0 0.0
    %698 = vmatpush2.xpose.msra.mxu0 0.0
    %699 = vmatprep.subr.mxu0 0.0
    %700 = vmatpush2.xpose.msra.mxu0 0.0
    %701 = vmatprep.subr.mxu0 0.0
    %702 = vmatpush2.xpose.msra.mxu0 0.0
    %703 = vmatprep.subr.mxu0 0.0
    %704 = vmatpush2.xpose.msra.mxu0 0.0
    %705 = vmatprep.subr.mxu0 0.0
    %706 = vmatpush2.xpose.msra.mxu0 0.0
    %707 = vmatprep.subr.mxu0 0.0
    %708 = vmatpush2.xpose.msra.mxu0 0.0
    %709 = vmatprep.subr.mxu0 0.0
    %710 = vmatpush2.xpose.msra.mxu0 0.0
    %711 = vmatprep.mubr.f32.mxu0 0.0
    %712 = vmatmul.mubr.f32.gmra.mxu0 %v643
    %v713 = vpop.f32.mrf.mxu0
    %v714 = vadd.f32 0.0, %v713
    %v715 = vpop.f32.mrf.mxu0
    %716 = vdwg.mxu0
    %717 = vrot.lane.b32.xlu0 %v183, 96
    %v718 = vpop.permute.xlu0 %717
    %v719 = vsel %vm186, %v183, 0
    %v721 = vsel %vm186, %v718, 0
    %723 = vmatprep.subr.mxu0 0.0
    %724 = vmatpush1.xpose.msra.mxu0 0.0
    %725 = vmatprep.subr.mxu0 0.0
    %726 = vmatpush1.xpose.msra.mxu0 0.0
    %727 = vmatprep.subr.mxu0 0.0
    %728 = vmatpush1.xpose.msra.mxu0 0.0
    %729 = vmatprep.subr.mxu0 0.0
    %730 = vmatpush1.xpose.msra.mxu0 0.0
    %731 = vmatprep.subr.mxu0 0.0
    %732 = vmatpush1.xpose.msra.mxu0 0.0
    %733 = vmatprep.subr.mxu0 0.0
    %734 = vmatpush1.xpose.msra.mxu0 0.0
    %735 = vmatprep.subr.mxu0 0.0
    %736 = vmatpush1.xpose.msra.mxu0 0.0
    %737 = vmatprep.subr.mxu0 0.0
    %738 = vmatpush1.xpose.msra.mxu0 0.0
    %739 = vmatprep.subr.mxu0 0.0
    %740 = vmatpush1.xpose.msra.mxu0 0.0
    %741 = vmatprep.subr.mxu0 0.0
    %742 = vmatpush1.xpose.msra.mxu0 0.0
    %743 = vmatprep.subr.mxu0 0.0
    %744 = vmatpush1.xpose.msra.mxu0 0.0
    %745 = vmatprep.subr.mxu0 0.0
    %746 = vmatpush1.xpose.msra.mxu0 0.0
    %747 = vmatprep.subr.mxu0 0.0
    %748 = vmatpush1.xpose.msra.mxu0 0.0
    %749 = vmatprep.subr.mxu0 0.0
    %750 = vmatpush1.xpose.msra.mxu0 0.0
    %751 = vmatprep.subr.mxu0 0.0
    %752 = vmatpush1.xpose.msra.mxu0 0.0
    %753 = vmatprep.subr.mxu0 0.0
    %754 = vmatpush1.xpose.msra.mxu0 %v721
    %755 = vmatprep.subr.mxu0 0.0
    %756 = vmatpush2.xpose.msra.mxu0 0.0
    %757 = vmatprep.subr.mxu0 0.0
    %758 = vmatpush2.xpose.msra.mxu0 0.0
    %759 = vmatprep.subr.mxu0 0.0
    %760 = vmatpush2.xpose.msra.mxu0 0.0
    %761 = vmatprep.subr.mxu0 0.0
    %762 = vmatpush2.xpose.msra.mxu0 0.0
    %763 = vmatprep.subr.mxu0 0.0
    %764 = vmatpush2.xpose.msra.mxu0 0.0
    %765 = vmatprep.subr.mxu0 0.0
    %766 = vmatpush2.xpose.msra.mxu0 0.0
    %767 = vmatprep.subr.mxu0 0.0
    %768 = vmatpush2.xpose.msra.mxu0 0.0
    %769 = vmatprep.subr.mxu0 0.0
    %770 = vmatpush2.xpose.msra.mxu0 0.0
    %771 = vmatprep.subr.mxu0 0.0
    %772 = vmatpush2.xpose.msra.mxu0 0.0
    %773 = vmatprep.subr.mxu0 0.0
    %774 = vmatpush2.xpose.msra.mxu0 0.0
    %775 = vmatprep.subr.mxu0 0.0
    %776 = vmatpush2.xpose.msra.mxu0 0.0
    %777 = vmatprep.subr.mxu0 0.0
    %778 = vmatpush2.xpose.msra.mxu0 0.0
    %779 = vmatprep.subr.mxu0 0.0
    %780 = vmatpush2.xpose.msra.mxu0 0.0
    %781 = vmatprep.subr.mxu0 0.0
    %782 = vmatpush2.xpose.msra.mxu0 0.0
    %783 = vmatprep.subr.mxu0 0.0
    %784 = vmatpush2.xpose.msra.mxu0 0.0
    %785 = vmatprep.subr.mxu0 0.0
    %786 = vmatpush2.xpose.msra.mxu0 0.0
    %787 = vmatprep.mubr.f32.mxu0 0.0
    %788 = vmatmul.mubr.f32.gmra.mxu0 %v719
    %v789 = vpop.f32.mrf.mxu0
    %v790 = vadd.f32 0.0, %v789
    %v791 = vpop.f32.mrf.mxu0
    %792 = vdwg.mxu0
    %v793 = vsel %vm186, %v258, -inf
    %794 = vmax.xlane.f32.xlu0 %v793
    %v795 = vpop.xlane.xlu0 %794
    %v796 = vsel %vm186, %v334, -inf
    %797 = vmax.xlane.f32.xlu0 %v796
    %v798 = vpop.xlane.xlu0 %797
    %v799 = vsel %vm186, %v410, -inf
    %800 = vmax.xlane.f32.xlu0 %v799
    %v801 = vpop.xlane.xlu0 %800
    %v802 = vsel %vm186, %v486, -inf
    %803 = vmax.xlane.f32.xlu0 %v802
    %v804 = vpop.xlane.xlu0 %803
    %v805 = vsel %vm186, %v562, -inf
    %806 = vmax.xlane.f32.xlu0 %v805
    %v807 = vpop.xlane.xlu0 %806
    %v808 = vsel %vm186, %v638, -inf
    %809 = vmax.xlane.f32.xlu0 %v808
    %v810 = vpop.xlane.xlu0 %809
    %v811 = vsel %vm186, %v714, -inf
    %812 = vmax.xlane.f32.xlu0 %v811
    %v813 = vpop.xlane.xlu0 %812
    %v814 = vsel %vm186, %v790, -inf
    %815 = vmax.xlane.f32.xlu0 %v814
    %v816 = vpop.xlane.xlu0 %815
    %v817 = vsub.f32 %v258, %v795
    %v818 = vsub.f32 %v334, %v798
    %v819 = vsub.f32 %v410, %v801
    %v820 = vsub.f32 %v486, %v804
    %v821 = vsub.f32 %v562, %v807
    %v822 = vsub.f32 %v638, %v810
    %v823 = vsub.f32 %v714, %v813
    %v824 = vsub.f32 %v790, %v816
    %v825 = vmul.f32 %v817, 1.442695
    %v826 = vpow.pop %v825
    %v827 = vmul.f32 %v818, 1.442695
    %v828 = vpow.pop %v827
    %v829 = vmul.f32 %v819, 1.442695
    %v830 = vpow.pop %v829
    %v831 = vmul.f32 %v820, 1.442695
    %v832 = vpow.pop %v831
    %v833 = vmul.f32 %v821, 1.442695
    %v834 = vpow.pop %v833
    %v835 = vmul.f32 %v822, 1.442695
    %v836 = vpow.pop %v835
    %v837 = vmul.f32 %v823, 1.442695
    %v838 = vpow.pop %v837
    %v839 = vmul.f32 %v824, 1.442695
    %v840 = vpow.pop %v839
    %v841 = vsel %vm186, %v826, 0.0
    %842 = vadd.xlane.f32.xlu0 %v841
    %v843 = vpop.xlane.xlu0 %842
    %v844 = vsel %vm186, %v828, 0.0
    %845 = vadd.xlane.f32.xlu0 %v844
    %v846 = vpop.xlane.xlu0 %845
    %v847 = vsel %vm186, %v830, 0.0
    %848 = vadd.xlane.f32.xlu0 %v847
    %v849 = vpop.xlane.xlu0 %848
    %v850 = vsel %vm186, %v832, 0.0
    %851 = vadd.xlane.f32.xlu0 %v850
    %v852 = vpop.xlane.xlu0 %851
    %v853 = vsel %vm186, %v834, 0.0
    %854 = vadd.xlane.f32.xlu0 %v853
    %v855 = vpop.xlane.xlu0 %854
    %v856 = vsel %vm186, %v836, 0.0
    %857 = vadd.xlane.f32.xlu0 %v856
    %v858 = vpop.xlane.xlu0 %857
    %v859 = vsel %vm186, %v838, 0.0
    %860 = vadd.xlane.f32.xlu0 %v859
    %v861 = vpop.xlane.xlu0 %860
    %v862 = vsel %vm186, %v840, 0.0
    %863 = vadd.xlane.f32.xlu0 %v862
    %v864 = vpop.xlane.xlu0 %863
    %v865 = vrcp.pop %v843
    %v866 = vrcp.pop %v846
    %v867 = vrcp.pop %v849
    %v868 = vrcp.pop %v852
    %v869 = vrcp.pop %v855
    %v870 = vrcp.pop %v858
    %v871 = vrcp.pop %v861
    %v872 = vrcp.pop %v864
    %v873 = vmul.f32 %v826, %v865
    %v874 = vmul.f32 %v828, %v866
    %v875 = vmul.f32 %v830, %v867
    %v876 = vmul.f32 %v832, %v868
    %v877 = vmul.f32 %v834, %v869
    %v878 = vmul.f32 %v836, %v870
    %v879 = vmul.f32 %v838, %v871
    %v880 = vmul.f32 %v840, %v872
    %881 = vrot.lane.b32.xlu0 %v162, 64
    %v882 = vpop.permute.xlu0 %881
    %v885 = vsel %vm186, %v873, 0
    %887 = vmatprep.subr.mxu0 0.0
    %888 = vmatpush1.msra.mxu0 0.0
    %889 = vmatprep.subr.mxu0 0.0
    %890 = vmatpush1.msra.mxu0 0.0
    %891 = vmatprep.subr.mxu0 0.0
    %892 = vmatpush1.msra.mxu0 0.0
    %893 = vmatprep.subr.mxu0 0.0
    %894 = vmatpush1.msra.mxu0 0.0
    %895 = vmatprep.subr.mxu0 0.0
    %896 = vmatpush1.msra.mxu0 0.0
    %897 = vmatprep.subr.mxu0 0.0
    %898 = vmatpush1.msra.mxu0 0.0
    %899 = vmatprep.subr.mxu0 0.0
    %900 = vmatpush1.msra.mxu0 0.0
    %901 = vmatprep.subr.mxu0 0.0
    %902 = vmatpush1.msra.mxu0 0.0
    %903 = vmatprep.subr.mxu0 0.0
    %904 = vmatpush1.msra.mxu0 0.0
    %905 = vmatprep.subr.mxu0 0.0
    %906 = vmatpush1.msra.mxu0 0.0
    %907 = vmatprep.subr.mxu0 0.0
    %908 = vmatpush1.msra.mxu0 0.0
    %909 = vmatprep.subr.mxu0 0.0
    %910 = vmatpush1.msra.mxu0 0.0
    %911 = vmatprep.subr.mxu0 0.0
    %912 = vmatpush1.msra.mxu0 0.0
    %913 = vmatprep.subr.mxu0 0.0
    %914 = vmatpush1.msra.mxu0 0.0
    %915 = vmatprep.subr.mxu0 0.0
    %916 = vmatpush1.msra.mxu0 0.0
    %917 = vmatprep.subr.mxu0 0.0
    %918 = vmatpush1.msra.mxu0 %v882
    %919 = vmatprep.subr.mxu0 0.0
    %920 = vmatpush2.msra.mxu0 0.0
    %921 = vmatprep.subr.mxu0 0.0
    %922 = vmatpush2.msra.mxu0 0.0
    %923 = vmatprep.subr.mxu0 0.0
    %924 = vmatpush2.msra.mxu0 0.0
    %925 = vmatprep.subr.mxu0 0.0
    %926 = vmatpush2.msra.mxu0 0.0
    %927 = vmatprep.subr.mxu0 0.0
    %928 = vmatpush2.msra.mxu0 0.0
    %929 = vmatprep.subr.mxu0 0.0
    %930 = vmatpush2.msra.mxu0 0.0
    %931 = vmatprep.subr.mxu0 0.0
    %932 = vmatpush2.msra.mxu0 0.0
    %933 = vmatprep.subr.mxu0 0.0
    %934 = vmatpush2.msra.mxu0 0.0
    %935 = vmatprep.subr.mxu0 0.0
    %936 = vmatpush2.msra.mxu0 0.0
    %937 = vmatprep.subr.mxu0 0.0
    %938 = vmatpush2.msra.mxu0 0.0
    %939 = vmatprep.subr.mxu0 0.0
    %940 = vmatpush2.msra.mxu0 0.0
    %941 = vmatprep.subr.mxu0 0.0
    %942 = vmatpush2.msra.mxu0 0.0
    %943 = vmatprep.subr.mxu0 0.0
    %944 = vmatpush2.msra.mxu0 0.0
    %945 = vmatprep.subr.mxu0 0.0
    %946 = vmatpush2.msra.mxu0 0.0
    %947 = vmatprep.subr.mxu0 0.0
    %948 = vmatpush2.msra.mxu0 0.0
    %949 = vmatprep.subr.mxu0 0.0
    %950 = vmatpush2.msra.mxu0 0.0
    %951 = vmatprep.mubr.f32.mxu0 0.0
    %952 = vmatmul.mubr.f32.gmra.mxu0 %v885
    %v953 = vpop.f32.mrf.mxu0
    %v954 = vadd.f32 0.0, %v953
    %v955 = vpop.f32.mrf.mxu0
    %956 = vdwg.mxu0
    %957 = vrot.lane.b32.xlu0 %v167, 64
    %v958 = vpop.permute.xlu0 %957
    %v961 = vsel %vm186, %v874, 0
    %963 = vmatprep.subr.mxu0 0.0
    %964 = vmatpush1.msra.mxu0 0.0
    %965 = vmatprep.subr.mxu0 0.0
    %966 = vmatpush1.msra.mxu0 0.0
    %967 = vmatprep.subr.mxu0 0.0
    %968 = vmatpush1.msra.mxu0 0.0
    %969 = vmatprep.subr.mxu0 0.0
    %970 = vmatpush1.msra.mxu0 0.0
    %971 = vmatprep.subr.mxu0 0.0
    %972 = vmatpush1.msra.mxu0 0.0
    %973 = vmatprep.subr.mxu0 0.0
    %974 = vmatpush1.msra.mxu0 0.0
    %975 = vmatprep.subr.mxu0 0.0
    %976 = vmatpush1.msra.mxu0 0.0
    %977 = vmatprep.subr.mxu0 0.0
    %978 = vmatpush1.msra.mxu0 0.0
    %979 = vmatprep.subr.mxu0 0.0
    %980 = vmatpush1.msra.mxu0 0.0
    %981 = vmatprep.subr.mxu0 0.0
    %982 = vmatpush1.msra.mxu0 0.0
    %983 = vmatprep.subr.mxu0 0.0
    %984 = vmatpush1.msra.mxu0 0.0
    %985 = vmatprep.subr.mxu0 0.0
    %986 = vmatpush1.msra.mxu0 0.0
    %987 = vmatprep.subr.mxu0 0.0
    %988 = vmatpush1.msra.mxu0 0.0
    %989 = vmatprep.subr.mxu0 0.0
    %990 = vmatpush1.msra.mxu0 0.0
    %991 = vmatprep.subr.mxu0 0.0
    %992 = vmatpush1.msra.mxu0 0.0
    %993 = vmatprep.subr.mxu0 0.0
    %994 = vmatpush1.msra.mxu0 %v958
    %995 = vmatprep.subr.mxu0 0.0
    %996 = vmatpush2.msra.mxu0 0.0
    %997 = vmatprep.subr.mxu0 0.0
    %998 = vmatpush2.msra.mxu0 0.0
    %999 = vmatprep.subr.mxu0 0.0
    %1000 = vmatpush2.msra.mxu0 0.0
    %1001 = vmatprep.subr.mxu0 0.0
    %1002 = vmatpush2.msra.mxu0 0.0
    %1003 = vmatprep.subr.mxu0 0.0
    %1004 = vmatpush2.msra.mxu0 0.0
    %1005 = vmatprep.subr.mxu0 0.0
    %1006 = vmatpush2.msra.mxu0 0.0
    %1007 = vmatprep.subr.mxu0 0.0
    %1008 = vmatpush2.msra.mxu0 0.0
    %1009 = vmatprep.subr.mxu0 0.0
    %1010 = vmatpush2.msra.mxu0 0.0
    %1011 = vmatprep.subr.mxu0 0.0
    %1012 = vmatpush2.msra.mxu0 0.0
    %1013 = vmatprep.subr.mxu0 0.0
    %1014 = vmatpush2.msra.mxu0 0.0
    %1015 = vmatprep.subr.mxu0 0.0
    %1016 = vmatpush2.msra.mxu0 0.0
    %1017 = vmatprep.subr.mxu0 0.0
    %1018 = vmatpush2.msra.mxu0 0.0
    %1019 = vmatprep.subr.mxu0 0.0
    %1020 = vmatpush2.msra.mxu0 0.0
    %1021 = vmatprep.subr.mxu0 0.0
    %1022 = vmatpush2.msra.mxu0 0.0
    %1023 = vmatprep.subr.mxu0 0.0
    %1024 = vmatpush2.msra.mxu0 0.0
    %1025 = vmatprep.subr.mxu0 0.0
    %1026 = vmatpush2.msra.mxu0 0.0
    %1027 = vmatprep.mubr.f32.mxu0 0.0
    %1028 = vmatmul.mubr.f32.gmra.mxu0 %v961
    %v1029 = vpop.f32.mrf.mxu0
    %v1030 = vadd.f32 0.0, %v1029
    %v1031 = vpop.f32.mrf.mxu0
    %1032 = vdwg.mxu0
    %1033 = vrot.lane.b32.xlu0 %v173, 64
    %v1034 = vpop.permute.xlu0 %1033
    %v1037 = vsel %vm186, %v875, 0
    %1039 = vmatprep.subr.mxu0 0.0
    %1040 = vmatpush1.msra.mxu0 0.0
    %1041 = vmatprep.subr.mxu0 0.0
    %1042 = vmatpush1.msra.mxu0 0.0
    %1043 = vmatprep.subr.mxu0 0.0
    %1044 = vmatpush1.msra.mxu0 0.0
    %1045 = vmatprep.subr.mxu0 0.0
    %1046 = vmatpush1.msra.mxu0 0.0
    %1047 = vmatprep.subr.mxu0 0.0
    %1048 = vmatpush1.msra.mxu0 0.0
    %1049 = vmatprep.subr.mxu0 0.0
    %1050 = vmatpush1.msra.mxu0 0.0
    %1051 = vmatprep.subr.mxu0 0.0
    %1052 = vmatpush1.msra.mxu0 0.0
    %1053 = vmatprep.subr.mxu0 0.0
    %1054 = vmatpush1.msra.mxu0 0.0
    %1055 = vmatprep.subr.mxu0 0.0
    %1056 = vmatpush1.msra.mxu0 0.0
    %1057 = vmatprep.subr.mxu0 0.0
    %1058 = vmatpush1.msra.mxu0 0.0
    %1059 = vmatprep.subr.mxu0 0.0
    %1060 = vmatpush1.msra.mxu0 0.0
    %1061 = vmatprep.subr.mxu0 0.0
    %1062 = vmatpush1.msra.mxu0 0.0
    %1063 = vmatprep.subr.mxu0 0.0
    %1064 = vmatpush1.msra.mxu0 0.0
    %1065 = vmatprep.subr.mxu0 0.0
    %1066 = vmatpush1.msra.mxu0 0.0
    %1067 = vmatprep.subr.mxu0 0.0
    %1068 = vmatpush1.msra.mxu0 0.0
    %1069 = vmatprep.subr.mxu0 0.0
    %1070 = vmatpush1.msra.mxu0 %v1034
    %1071 = vmatprep.subr.mxu0 0.0
    %1072 = vmatpush2.msra.mxu0 0.0
    %1073 = vmatprep.subr.mxu0 0.0
    %1074 = vmatpush2.msra.mxu0 0.0
    %1075 = vmatprep.subr.mxu0 0.0
    %1076 = vmatpush2.msra.mxu0 0.0
    %1077 = vmatprep.subr.mxu0 0.0
    %1078 = vmatpush2.msra.mxu0 0.0
    %1079 = vmatprep.subr.mxu0 0.0
    %1080 = vmatpush2.msra.mxu0 0.0
    %1081 = vmatprep.subr.mxu0 0.0
    %1082 = vmatpush2.msra.mxu0 0.0
    %1083 = vmatprep.subr.mxu0 0.0
    %1084 = vmatpush2.msra.mxu0 0.0
    %1085 = vmatprep.subr.mxu0 0.0
    %1086 = vmatpush2.msra.mxu0 0.0
    %1087 = vmatprep.subr.mxu0 0.0
    %1088 = vmatpush2.msra.mxu0 0.0
    %1089 = vmatprep.subr.mxu0 0.0
    %1090 = vmatpush2.msra.mxu0 0.0
    %1091 = vmatprep.subr.mxu0 0.0
    %1092 = vmatpush2.msra.mxu0 0.0
    %1093 = vmatprep.subr.mxu0 0.0
    %1094 = vmatpush2.msra.mxu0 0.0
    %1095 = vmatprep.subr.mxu0 0.0
    %1096 = vmatpush2.msra.mxu0 0.0
    %1097 = vmatprep.subr.mxu0 0.0
    %1098 = vmatpush2.msra.mxu0 0.0
    %1099 = vmatprep.subr.mxu0 0.0
    %1100 = vmatpush2.msra.mxu0 0.0
    %1101 = vmatprep.subr.mxu0 0.0
    %1102 = vmatpush2.msra.mxu0 0.0
    %1103 = vmatprep.mubr.f32.mxu0 0.0
    %1104 = vmatmul.mubr.f32.gmra.mxu0 %v1037
    %v1105 = vpop.f32.mrf.mxu0
    %v1106 = vadd.f32 0.0, %v1105
    %v1107 = vpop.f32.mrf.mxu0
    %1108 = vdwg.mxu0
    %1109 = vrot.lane.b32.xlu0 %v175, 64
    %v1110 = vpop.permute.xlu0 %1109
    %v1113 = vsel %vm186, %v876, 0
    %1115 = vmatprep.subr.mxu0 0.0
    %1116 = vmatpush1.msra.mxu0 0.0
    %1117 = vmatprep.subr.mxu0 0.0
    %1118 = vmatpush1.msra.mxu0 0.0
    %1119 = vmatprep.subr.mxu0 0.0
    %1120 = vmatpush1.msra.mxu0 0.0
    %1121 = vmatprep.subr.mxu0 0.0
    %1122 = vmatpush1.msra.mxu0 0.0
    %1123 = vmatprep.subr.mxu0 0.0
    %1124 = vmatpush1.msra.mxu0 0.0
    %1125 = vmatprep.subr.mxu0 0.0
    %1126 = vmatpush1.msra.mxu0 0.0
    %1127 = vmatprep.subr.mxu0 0.0
    %1128 = vmatpush1.msra.mxu0 0.0
    %1129 = vmatprep.subr.mxu0 0.0
    %1130 = vmatpush1.msra.mxu0 0.0
    %1131 = vmatprep.subr.mxu0 0.0
    %1132 = vmatpush1.msra.mxu0 0.0
    %1133 = vmatprep.subr.mxu0 0.0
    %1134 = vmatpush1.msra.mxu0 0.0
    %1135 = vmatprep.subr.mxu0 0.0
    %1136 = vmatpush1.msra.mxu0 0.0
    %1137 = vmatprep.subr.mxu0 0.0
    %1138 = vmatpush1.msra.mxu0 0.0
    %1139 = vmatprep.subr.mxu0 0.0
    %1140 = vmatpush1.msra.mxu0 0.0
    %1141 = vmatprep.subr.mxu0 0.0
    %1142 = vmatpush1.msra.mxu0 0.0
    %1143 = vmatprep.subr.mxu0 0.0
    %1144 = vmatpush1.msra.mxu0 0.0
    %1145 = vmatprep.subr.mxu0 0.0
    %1146 = vmatpush1.msra.mxu0 %v1110
    %1147 = vmatprep.subr.mxu0 0.0
    %1148 = vmatpush2.msra.mxu0 0.0
    %1149 = vmatprep.subr.mxu0 0.0
    %1150 = vmatpush2.msra.mxu0 0.0
    %1151 = vmatprep.subr.mxu0 0.0
    %1152 = vmatpush2.msra.mxu0 0.0
    %1153 = vmatprep.subr.mxu0 0.0
    %1154 = vmatpush2.msra.mxu0 0.0
    %1155 = vmatprep.subr.mxu0 0.0
    %1156 = vmatpush2.msra.mxu0 0.0
    %1157 = vmatprep.subr.mxu0 0.0
    %1158 = vmatpush2.msra.mxu0 0.0
    %1159 = vmatprep.subr.mxu0 0.0
    %1160 = vmatpush2.msra.mxu0 0.0
    %1161 = vmatprep.subr.mxu0 0.0
    %1162 = vmatpush2.msra.mxu0 0.0
    %1163 = vmatprep.subr.mxu0 0.0
    %1164 = vmatpush2.msra.mxu0 0.0
    %1165 = vmatprep.subr.mxu0 0.0
    %1166 = vmatpush2.msra.mxu0 0.0
    %1167 = vmatprep.subr.mxu0 0.0
    %1168 = vmatpush2.msra.mxu0 0.0
    %1169 = vmatprep.subr.mxu0 0.0
    %1170 = vmatpush2.msra.mxu0 0.0
    %1171 = vmatprep.subr.mxu0 0.0
    %1172 = vmatpush2.msra.mxu0 0.0
    %1173 = vmatprep.subr.mxu0 0.0
    %1174 = vmatpush2.msra.mxu0 0.0
    %1175 = vmatprep.subr.mxu0 0.0
    %1176 = vmatpush2.msra.mxu0 0.0
    %1177 = vmatprep.subr.mxu0 0.0
    %1178 = vmatpush2.msra.mxu0 0.0
    %1179 = vmatprep.mubr.f32.mxu0 0.0
    %1180 = vmatmul.mubr.f32.gmra.mxu0 %v1113
    %v1181 = vpop.f32.mrf.mxu0
    %v1182 = vadd.f32 0.0, %v1181
    %v1183 = vpop.f32.mrf.mxu0
    %1184 = vdwg.mxu0
    %1185 = vrot.lane.b32.xlu0 %v177, 64
    %v1186 = vpop.permute.xlu0 %1185
    %v1189 = vsel %vm186, %v877, 0
    %1191 = vmatprep.subr.mxu0 0.0
    %1192 = vmatpush1.msra.mxu0 0.0
    %1193 = vmatprep.subr.mxu0 0.0
    %1194 = vmatpush1.msra.mxu0 0.0
    %1195 = vmatprep.subr.mxu0 0.0
    %1196 = vmatpush1.msra.mxu0 0.0
    %1197 = vmatprep.subr.mxu0 0.0
    %1198 = vmatpush1.msra.mxu0 0.0
    %1199 = vmatprep.subr.mxu0 0.0
    %1200 = vmatpush1.msra.mxu0 0.0
    %1201 = vmatprep.subr.mxu0 0.0
    %1202 = vmatpush1.msra.mxu0 0.0
    %1203 = vmatprep.subr.mxu0 0.0
    %1204 = vmatpush1.msra.mxu0 0.0
    %1205 = vmatprep.subr.mxu0 0.0
    %1206 = vmatpush1.msra.mxu0 0.0
    %1207 = vmatprep.subr.mxu0 0.0
    %1208 = vmatpush1.msra.mxu0 0.0
    %1209 = vmatprep.subr.mxu0 0.0
    %1210 = vmatpush1.msra.mxu0 0.0
    %1211 = vmatprep.subr.mxu0 0.0
    %1212 = vmatpush1.msra.mxu0 0.0
    %1213 = vmatprep.subr.mxu0 0.0
    %1214 = vmatpush1.msra.mxu0 0.0
    %1215 = vmatprep.subr.mxu0 0.0
    %1216 = vmatpush1.msra.mxu0 0.0
    %1217 = vmatprep.subr.mxu0 0.0
    %1218 = vmatpush1.msra.mxu0 0.0
    %1219 = vmatprep.subr.mxu0 0.0
    %1220 = vmatpush1.msra.mxu0 0.0
    %1221 = vmatprep.subr.mxu0 0.0
    %1222 = vmatpush1.msra.mxu0 %v1186
    %1223 = vmatprep.subr.mxu0 0.0
    %1224 = vmatpush2.msra.mxu0 0.0
    %1225 = vmatprep.subr.mxu0 0.0
    %1226 = vmatpush2.msra.mxu0 0.0
    %1227 = vmatprep.subr.mxu0 0.0
    %1228 = vmatpush2.msra.mxu0 0.0
    %1229 = vmatprep.subr.mxu0 0.0
    %1230 = vmatpush2.msra.mxu0 0.0
    %1231 = vmatprep.subr.mxu0 0.0
    %1232 = vmatpush2.msra.mxu0 0.0
    %1233 = vmatprep.subr.mxu0 0.0
    %1234 = vmatpush2.msra.mxu0 0.0
    %1235 = vmatprep.subr.mxu0 0.0
    %1236 = vmatpush2.msra.mxu0 0.0
    %1237 = vmatprep.subr.mxu0 0.0
    %1238 = vmatpush2.msra.mxu0 0.0
    %1239 = vmatprep.subr.mxu0 0.0
    %1240 = vmatpush2.msra.mxu0 0.0
    %1241 = vmatprep.subr.mxu0 0.0
    %1242 = vmatpush2.msra.mxu0 0.0
    %1243 = vmatprep.subr.mxu0 0.0
    %1244 = vmatpush2.msra.mxu0 0.0
    %1245 = vmatprep.subr.mxu0 0.0
    %1246 = vmatpush2.msra.mxu0 0.0
    %1247 = vmatprep.subr.mxu0 0.0
    %1248 = vmatpush2.msra.mxu0 0.0
    %1249 = vmatprep.subr.mxu0 0.0
    %1250 = vmatpush2.msra.mxu0 0.0
    %1251 = vmatprep.subr.mxu0 0.0
    %1252 = vmatpush2.msra.mxu0 0.0
    %1253 = vmatprep.subr.mxu0 0.0
    %1254 = vmatpush2.msra.mxu0 0.0
    %1255 = vmatprep.mubr.f32.mxu0 0.0
    %1256 = vmatmul.mubr.f32.gmra.mxu0 %v1189
    %v1257 = vpop.f32.mrf.mxu0
    %v1258 = vadd.f32 0.0, %v1257
    %v1259 = vpop.f32.mrf.mxu0
    %1260 = vdwg.mxu0
    %1261 = vrot.lane.b32.xlu0 %v179, 64
    %v1262 = vpop.permute.xlu0 %1261
    %v1265 = vsel %vm186, %v878, 0
    %1267 = vmatprep.subr.mxu0 0.0
    %1268 = vmatpush1.msra.mxu0 0.0
    %1269 = vmatprep.subr.mxu0 0.0
    %1270 = vmatpush1.msra.mxu0 0.0
    %1271 = vmatprep.subr.mxu0 0.0
    %1272 = vmatpush1.msra.mxu0 0.0
    %1273 = vmatprep.subr.mxu0 0.0
    %1274 = vmatpush1.msra.mxu0 0.0
    %1275 = vmatprep.subr.mxu0 0.0
    %1276 = vmatpush1.msra.mxu0 0.0
    %1277 = vmatprep.subr.mxu0 0.0
    %1278 = vmatpush1.msra.mxu0 0.0
    %1279 = vmatprep.subr.mxu0 0.0
    %1280 = vmatpush1.msra.mxu0 0.0
    %1281 = vmatprep.subr.mxu0 0.0
    %1282 = vmatpush1.msra.mxu0 0.0
    %1283 = vmatprep.subr.mxu0 0.0
    %1284 = vmatpush1.msra.mxu0 0.0
    %1285 = vmatprep.subr.mxu0 0.0
    %1286 = vmatpush1.msra.mxu0 0.0
    %1287 = vmatprep.subr.mxu0 0.0
    %1288 = vmatpush1.msra.mxu0 0.0
    %1289 = vmatprep.subr.mxu0 0.0
    %1290 = vmatpush1.msra.mxu0 0.0
    %1291 = vmatprep.subr.mxu0 0.0
    %1292 = vmatpush1.msra.mxu0 0.0
    %1293 = vmatprep.subr.mxu0 0.0
    %1294 = vmatpush1.msra.mxu0 0.0
    %1295 = vmatprep.subr.mxu0 0.0
    %1296 = vmatpush1.msra.mxu0 0.0
    %1297 = vmatprep.subr.mxu0 0.0
    %1298 = vmatpush1.msra.mxu0 %v1262
    %1299 = vmatprep.subr.mxu0 0.0
    %1300 = vmatpush2.msra.mxu0 0.0
    %1301 = vmatprep.subr.mxu0 0.0
    %1302 = vmatpush2.msra.mxu0 0.0
    %1303 = vmatprep.subr.mxu0 0.0
    %1304 = vmatpush2.msra.mxu0 0.0
    %1305 = vmatprep.subr.mxu0 0.0
    %1306 = vmatpush2.msra.mxu0 0.0
    %1307 = vmatprep.subr.mxu0 0.0
    %1308 = vmatpush2.msra.mxu0 0.0
    %1309 = vmatprep.subr.mxu0 0.0
    %1310 = vmatpush2.msra.mxu0 0.0
    %1311 = vmatprep.subr.mxu0 0.0
    %1312 = vmatpush2.msra.mxu0 0.0
    %1313 = vmatprep.subr.mxu0 0.0
    %1314 = vmatpush2.msra.mxu0 0.0
    %1315 = vmatprep.subr.mxu0 0.0
    %1316 = vmatpush2.msra.mxu0 0.0
    %1317 = vmatprep.subr.mxu0 0.0
    %1318 = vmatpush2.msra.mxu0 0.0
    %1319 = vmatprep.subr.mxu0 0.0
    %1320 = vmatpush2.msra.mxu0 0.0
    %1321 = vmatprep.subr.mxu0 0.0
    %1322 = vmatpush2.msra.mxu0 0.0
    %1323 = vmatprep.subr.mxu0 0.0
    %1324 = vmatpush2.msra.mxu0 0.0
    %1325 = vmatprep.subr.mxu0 0.0
    %1326 = vmatpush2.msra.mxu0 0.0
    %1327 = vmatprep.subr.mxu0 0.0
    %1328 = vmatpush2.msra.mxu0 0.0
    %1329 = vmatprep.subr.mxu0 0.0
    %1330 = vmatpush2.msra.mxu0 0.0
    %1331 = vmatprep.mubr.f32.mxu0 0.0
    %1332 = vmatmul.mubr.f32.gmra.mxu0 %v1265
    %v1333 = vpop.f32.mrf.mxu0
    %v1334 = vadd.f32 0.0, %v1333
    %v1335 = vpop.f32.mrf.mxu0
    %1336 = vdwg.mxu0
    %1337 = vrot.lane.b32.xlu0 %v181, 64
    %v1338 = vpop.permute.xlu0 %1337
    %v1341 = vsel %vm186, %v879, 0
    %1343 = vmatprep.subr.mxu0 0.0
    %1344 = vmatpush1.msra.mxu0 0.0
    %1345 = vmatprep.subr.mxu0 0.0
    %1346 = vmatpush1.msra.mxu0 0.0
    %1347 = vmatprep.subr.mxu0 0.0
    %1348 = vmatpush1.msra.mxu0 0.0
    %1349 = vmatprep.subr.mxu0 0.0
    %1350 = vmatpush1.msra.mxu0 0.0
    %1351 = vmatprep.subr.mxu0 0.0
    %1352 = vmatpush1.msra.mxu0 0.0
    %1353 = vmatprep.subr.mxu0 0.0
    %1354 = vmatpush1.msra.mxu0 0.0
    %1355 = vmatprep.subr.mxu0 0.0
    %1356 = vmatpush1.msra.mxu0 0.0
    %1357 = vmatprep.subr.mxu0 0.0
    %1358 = vmatpush1.msra.mxu0 0.0
    %1359 = vmatprep.subr.mxu0 0.0
    %1360 = vmatpush1.msra.mxu0 0.0
    %1361 = vmatprep.subr.mxu0 0.0
    %1362 = vmatpush1.msra.mxu0 0.0
    %1363 = vmatprep.subr.mxu0 0.0
    %1364 = vmatpush1.msra.mxu0 0.0
    %1365 = vmatprep.subr.mxu0 0.0
    %1366 = vmatpush1.msra.mxu0 0.0
    %1367 = vmatprep.subr.mxu0 0.0
    %1368 = vmatpush1.msra.mxu0 0.0
    %1369 = vmatprep.subr.mxu0 0.0
    %1370 = vmatpush1.msra.mxu0 0.0
    %1371 = vmatprep.subr.mxu0 0.0
    %1372 = vmatpush1.msra.mxu0 0.0
    %1373 = vmatprep.subr.mxu0 0.0
    %1374 = vmatpush1.msra.mxu0 %v1338
    %1375 = vmatprep.subr.mxu0 0.0
    %1376 = vmatpush2.msra.mxu0 0.0
    %1377 = vmatprep.subr.mxu0 0.0
    %1378 = vmatpush2.msra.mxu0 0.0
    %1379 = vmatprep.subr.mxu0 0.0
    %1380 = vmatpush2.msra.mxu0 0.0
    %1381 = vmatprep.subr.mxu0 0.0
    %1382 = vmatpush2.msra.mxu0 0.0
    %1383 = vmatprep.subr.mxu0 0.0
    %1384 = vmatpush2.msra.mxu0 0.0
    %1385 = vmatprep.subr.mxu0 0.0
    %1386 = vmatpush2.msra.mxu0 0.0
    %1387 = vmatprep.subr.mxu0 0.0
    %1388 = vmatpush2.msra.mxu0 0.0
    %1389 = vmatprep.subr.mxu0 0.0
    %1390 = vmatpush2.msra.mxu0 0.0
    %1391 = vmatprep.subr.mxu0 0.0
    %1392 = vmatpush2.msra.mxu0 0.0
    %1393 = vmatprep.subr.mxu0 0.0
    %1394 = vmatpush2.msra.mxu0 0.0
    %1395 = vmatprep.subr.mxu0 0.0
    %1396 = vmatpush2.msra.mxu0 0.0
    %1397 = vmatprep.subr.mxu0 0.0
    %1398 = vmatpush2.msra.mxu0 0.0
    %1399 = vmatprep.subr.mxu0 0.0
    %1400 = vmatpush2.msra.mxu0 0.0
    %1401 = vmatprep.subr.mxu0 0.0
    %1402 = vmatpush2.msra.mxu0 0.0
    %1403 = vmatprep.subr.mxu0 0.0
    %1404 = vmatpush2.msra.mxu0 0.0
    %1405 = vmatprep.subr.mxu0 0.0
    %1406 = vmatpush2.msra.mxu0 0.0
    %1407 = vmatprep.mubr.f32.mxu0 0.0
    %1408 = vmatmul.mubr.f32.gmra.mxu0 %v1341
    %v1409 = vpop.f32.mrf.mxu0
    %v1410 = vadd.f32 0.0, %v1409
    %v1411 = vpop.f32.mrf.mxu0
    %1412 = vdwg.mxu0
    %1413 = vrot.lane.b32.xlu0 %v183, 64
    %v1414 = vpop.permute.xlu0 %1413
    %v1417 = vsel %vm186, %v880, 0
    %1419 = vmatprep.subr.mxu0 0.0
    %1420 = vmatpush1.msra.mxu0 0.0
    %1421 = vmatprep.subr.mxu0 0.0
    %1422 = vmatpush1.msra.mxu0 0.0
    %1423 = vmatprep.subr.mxu0 0.0
    %1424 = vmatpush1.msra.mxu0 0.0
    %1425 = vmatprep.subr.mxu0 0.0
    %1426 = vmatpush1.msra.mxu0 0.0
    %1427 = vmatprep.subr.mxu0 0.0
    %1428 = vmatpush1.msra.mxu0 0.0
    %1429 = vmatprep.subr.mxu0 0.0
    %1430 = vmatpush1.msra.mxu0 0.0
    %1431 = vmatprep.subr.mxu0 0.0
    %1432 = vmatpush1.msra.mxu0 0.0
    %1433 = vmatprep.subr.mxu0 0.0
    %1434 = vmatpush1.msra.mxu0 0.0
    %1435 = vmatprep.subr.mxu0 0.0
    %1436 = vmatpush1.msra.mxu0 0.0
    %1437 = vmatprep.subr.mxu0 0.0
    %1438 = vmatpush1.msra.mxu0 0.0
    %1439 = vmatprep.subr.mxu0 0.0
    %1440 = vmatpush1.msra.mxu0 0.0
    %1441 = vmatprep.subr.mxu0 0.0
    %1442 = vmatpush1.msra.mxu0 0.0
    %1443 = vmatprep.subr.mxu0 0.0
    %1444 = vmatpush1.msra.mxu0 0.0
    %1445 = vmatprep.subr.mxu0 0.0
    %1446 = vmatpush1.msra.mxu0 0.0
    %1447 = vmatprep.subr.mxu0 0.0
    %1448 = vmatpush1.msra.mxu0 0.0
    %1449 = vmatprep.subr.mxu0 0.0
    %1450 = vmatpush1.msra.mxu0 %v1414
    %1451 = vmatprep.subr.mxu0 0.0
    %1452 = vmatpush2.msra.mxu0 0.0
    %1453 = vmatprep.subr.mxu0 0.0
    %1454 = vmatpush2.msra.mxu0 0.0
    %1455 = vmatprep.subr.mxu0 0.0
    %1456 = vmatpush2.msra.mxu0 0.0
    %1457 = vmatprep.subr.mxu0 0.0
    %1458 = vmatpush2.msra.mxu0 0.0
    %1459 = vmatprep.subr.mxu0 0.0
    %1460 = vmatpush2.msra.mxu0 0.0
    %1461 = vmatprep.subr.mxu0 0.0
    %1462 = vmatpush2.msra.mxu0 0.0
    %1463 = vmatprep.subr.mxu0 0.0
    %1464 = vmatpush2.msra.mxu0 0.0
    %1465 = vmatprep.subr.mxu0 0.0
    %1466 = vmatpush2.msra.mxu0 0.0
    %1467 = vmatprep.subr.mxu0 0.0
    %1468 = vmatpush2.msra.mxu0 0.0
    %1469 = vmatprep.subr.mxu0 0.0
    %1470 = vmatpush2.msra.mxu0 0.0
    %1471 = vmatprep.subr.mxu0 0.0
    %1472 = vmatpush2.msra.mxu0 0.0
    %1473 = vmatprep.subr.mxu0 0.0
    %1474 = vmatpush2.msra.mxu0 0.0
    %1475 = vmatprep.subr.mxu0 0.0
    %1476 = vmatpush2.msra.mxu0 0.0
    %1477 = vmatprep.subr.mxu0 0.0
    %1478 = vmatpush2.msra.mxu0 0.0
    %1479 = vmatprep.subr.mxu0 0.0
    %1480 = vmatpush2.msra.mxu0 0.0
    %1481 = vmatprep.subr.mxu0 0.0
    %1482 = vmatpush2.msra.mxu0 0.0
    %1483 = vmatprep.mubr.f32.mxu0 0.0
    %1484 = vmatmul.mubr.f32.gmra.mxu0 %v1417
    %v1485 = vpop.f32.mrf.mxu0
    %v1486 = vadd.f32 0.0, %v1485
    %v1487 = vpop.f32.mrf.mxu0
    %1488 = vdwg.mxu0
    %1491 = vrot.lane.b32.xlu0 %v1106, 8
    %v1492 = vpop.permute.xlu0 %1491
    %1493 = vrot.lane.b32.xlu0 %v1182, 8
    %v1494 = vpop.permute.xlu0 %1493
    %1499 = vrot.lane.b32.xlu0 %v1258, 16
    %v1500 = vpop.permute.xlu0 %1499
    %1501 = vrot.lane.b32.xlu0 %v1334, 16
    %v1502 = vpop.permute.xlu0 %1501
    %1507 = vrot.lane.b32.xlu0 %v1410, 24
    %v1508 = vpop.permute.xlu0 %1507
    %1509 = vrot.lane.b32.xlu0 %v1486, 24
    %v1510 = vpop.permute.xlu0 %1509
    %v1513 = vsel %vm186, %v954, %v1492
    %v1514 = vsel %vm186, %v1030, %v1494
    %vm1515 = vcmask 130048
    %v1516 = vsel %vm1515, %v1513, %v1500
    %v1517 = vsel %vm1515, %v1514, %v1502
    %vm1518 = vcmask 195584
    %v1519 = vsel %vm1518, %v1516, %v1508
    %v1520 = vsel %vm1518, %v1517, %v1510
    %v1521 = vld [vmem:[%s3] sm:$0xff]
    %v1522 = vld [vmem:[%s3 + $0x8] sm:$0xff]
    %v1523 = vld [vmem:[%s3 + $0x10] sm:$0xff]
    %v1524 = vld [vmem:[%s3 + $0x18] sm:$0xff]
    %v1525 = vlaneseq
    %v1526 = vshrl.u32 %v1525, 7
    %v1527 = vsub.s32 1, %v1526
    %v1528 = vrot.slane %v52, %v1527
    %v1530 = vsel %vm53, %v1519, 0
    %v1533 = vsel %vm53, %v1520, 0
    %1535 = vmatprep.subr.mxu0 0.0
    %1536 = vmatpush1.msra.mxu0 0.0
    %1537 = vmatprep.subr.mxu0 0.0
    %1538 = vmatpush1.msra.mxu0 0.0
    %1539 = vmatprep.subr.mxu0 0.0
    %1540 = vmatpush1.msra.mxu0 0.0
    %1541 = vmatprep.subr.mxu0 0.0
    %1542 = vmatpush1.msra.mxu0 0.0
    %1543 = vmatprep.subr.mxu0 0.0
    %1544 = vmatpush1.msra.mxu0 0.0
    %1545 = vmatprep.subr.mxu0 0.0
    %1546 = vmatpush1.msra.mxu0 0.0
    %1547 = vmatprep.subr.mxu0 0.0
    %1548 = vmatpush1.msra.mxu0 0.0
    %1549 = vmatprep.subr.mxu0 0.0
    %1550 = vmatpush1.msra.mxu0 0.0
    %1551 = vmatprep.subr.mxu0 0.0
    %1552 = vmatpush1.msra.mxu0 0.0
    %1553 = vmatprep.subr.mxu0 0.0
    %1554 = vmatpush1.msra.mxu0 0.0
    %1555 = vmatprep.subr.mxu0 0.0
    %1556 = vmatpush1.msra.mxu0 0.0
    %1557 = vmatprep.subr.mxu0 0.0
    %1558 = vmatpush1.msra.mxu0 0.0
    %1559 = vmatprep.subr.mxu0 0.0
    %1560 = vmatpush1.msra.mxu0 %v1524
    %1561 = vmatprep.subr.mxu0 0.0
    %1562 = vmatpush1.msra.mxu0 %v1523
    %1563 = vmatprep.subr.mxu0 0.0
    %1564 = vmatpush1.msra.mxu0 %v1522
    %1565 = vmatprep.subr.mxu0 0.0
    %1566 = vmatpush1.msra.mxu0 %v1521
    %1567 = vmatprep.subr.mxu0 0.0
    %1568 = vmatpush2.msra.mxu0 0.0
    %1569 = vmatprep.subr.mxu0 0.0
    %1570 = vmatpush2.msra.mxu0 0.0
    %1571 = vmatprep.subr.mxu0 0.0
    %1572 = vmatpush2.msra.mxu0 0.0
    %1573 = vmatprep.subr.mxu0 0.0
    %1574 = vmatpush2.msra.mxu0 0.0
    %1575 = vmatprep.subr.mxu0 0.0
    %1576 = vmatpush2.msra.mxu0 0.0
    %1577 = vmatprep.subr.mxu0 0.0
    %1578 = vmatpush2.msra.mxu0 0.0
    %1579 = vmatprep.subr.mxu0 0.0
    %1580 = vmatpush2.msra.mxu0 0.0
    %1581 = vmatprep.subr.mxu0 0.0
    %1582 = vmatpush2.msra.mxu0 0.0
    %1583 = vmatprep.subr.mxu0 0.0
    %1584 = vmatpush2.msra.mxu0 0.0
    %1585 = vmatprep.subr.mxu0 0.0
    %1586 = vmatpush2.msra.mxu0 0.0
    %1587 = vmatprep.subr.mxu0 0.0
    %1588 = vmatpush2.msra.mxu0 0.0
    %1589 = vmatprep.subr.mxu0 0.0
    %1590 = vmatpush2.msra.mxu0 0.0
    %1591 = vmatprep.subr.mxu0 0.0
    %1592 = vmatpush2.msra.mxu0 0.0
    %1593 = vmatprep.subr.mxu0 0.0
    %1594 = vmatpush2.msra.mxu0 0.0
    %1595 = vmatprep.subr.mxu0 0.0
    %1596 = vmatpush2.msra.mxu0 0.0
    %1597 = vmatprep.subr.mxu0 0.0
    %1598 = vmatpush2.msra.mxu0 0.0
    %1599 = vmatprep.mubr.f32.mxu0 0.0
    %1600 = vmatmul.mubr.f32.gmra.mxu0 %v1530
    %v1601 = vpop.f32.mrf.mxu0
    %v1602 = vadd.f32 %v1528, %v1601
    %v1603 = vpop.f32.mrf.mxu0
    %1604 = vmatprep.mubr.f32.mxu0 0.0
    %1605 = vmatmul.mubr.f32.gmra.mxu0 %v1533
    %v1606 = vpop.f32.mrf.mxu0
    %v1607 = vadd.f32 %v1528, %v1606
    %v1608 = vpop.f32.mrf.mxu0
    %1609 = vdwg.mxu0
    %v1610 = vadd.f32 %v50, %v1602
    %v1611 = vadd.f32 %v51, %v1607
    %v1612 = vsel %vm53, %v1610, 0.0
    %1613 = vadd.xlane.f32.xlu0 %v1612
    %v1614 = vpop.xlane.xlu0 %1613
    %v1615 = vsel %vm53, %v1611, 0.0
    %1616 = vadd.xlane.f32.xlu0 %v1615
    %v1617 = vpop.xlane.xlu0 %1616
    %v1618 = vmul.f32 %v1614, %v60
    %v1619 = vmul.f32 %v1617, %v60
    %v1620 = vsub.f32 %v1610, %v1618
    %v1621 = vsub.f32 %v1611, %v1619
    %v1622 = vmul.f32 %v1620, %v1620
    %v1623 = vmul.f32 %v1621, %v1621
    %v1624 = vsel %vm53, %v1622, 0.0
    %1625 = vadd.xlane.f32.xlu0 %v1624
    %v1626 = vpop.xlane.xlu0 %1625
    %v1627 = vsel %vm53, %v1623, 0.0
    %1628 = vadd.xlane.f32.xlu0 %v1627
    %v1629 = vpop.xlane.xlu0 %1628
    %v1630 = vmul.f32 %v1626, %v60
    %v1631 = vmul.f32 %v1629, %v60
    %v1632 = vadd.f32 %v1630, 1e-05
    %v1633 = vadd.f32 %v1631, 1e-05
    %v1634 = vrsqrt.pop %v1632
    %v1635 = vrsqrt.pop %v1633
    %v1636 = vmul.f32 %v1620, %v1634
    %v1637 = vmul.f32 %v1621, %v1635
    %v1638 = vld [vmem:[%s4] sm:$0xff]
    %v1639 = vld [vmem:[%s4 + $0x8] sm:$0xff]
    %v1640 = vld [vmem:[%s4 + $0x10] sm:$0xff]
    %v1641 = vld [vmem:[%s4 + $0x18] sm:$0xff]
    %v1642 = vlaneseq
    %v1643 = vshrl.u32 %v1642, 7
    %v1644 = vsub.s32 2, %v1643
    %v1645 = vrot.slane %v52, %v1644
    %v1647 = vsel %vm53, %v1636, 0
    %v1650 = vsel %vm53, %v1637, 0
    %1652 = vmatprep.subr.mxu0 0.0
    %1653 = vmatpush1.msra.mxu0 0.0
    %1654 = vmatprep.subr.mxu0 0.0
    %1655 = vmatpush1.msra.mxu0 0.0
    %1656 = vmatprep.subr.mxu0 0.0
    %1657 = vmatpush1.msra.mxu0 0.0
    %1658 = vmatprep.subr.mxu0 0.0
    %1659 = vmatpush1.msra.mxu0 0.0
    %1660 = vmatprep.subr.mxu0 0.0
    %1661 = vmatpush1.msra.mxu0 0.0
    %1662 = vmatprep.subr.mxu0 0.0
    %1663 = vmatpush1.msra.mxu0 0.0
    %1664 = vmatprep.subr.mxu0 0.0
    %1665 = vmatpush1.msra.mxu0 0.0
    %1666 = vmatprep.subr.mxu0 0.0
    %1667 = vmatpush1.msra.mxu0 0.0
    %1668 = vmatprep.subr.mxu0 0.0
    %1669 = vmatpush1.msra.mxu0 0.0
    %1670 = vmatprep.subr.mxu0 0.0
    %1671 = vmatpush1.msra.mxu0 0.0
    %1672 = vmatprep.subr.mxu0 0.0
    %1673 = vmatpush1.msra.mxu0 0.0
    %1674 = vmatprep.subr.mxu0 0.0
    %1675 = vmatpush1.msra.mxu0 0.0
    %1676 = vmatprep.subr.mxu0 0.0
    %1677 = vmatpush1.msra.mxu0 %v1641
    %1678 = vmatprep.subr.mxu0 0.0
    %1679 = vmatpush1.msra.mxu0 %v1640
    %1680 = vmatprep.subr.mxu0 0.0
    %1681 = vmatpush1.msra.mxu0 %v1639
    %1682 = vmatprep.subr.mxu0 0.0
    %1683 = vmatpush1.msra.mxu0 %v1638
    %1684 = vmatprep.subr.mxu0 0.0
    %1685 = vmatpush2.msra.mxu0 0.0
    %1686 = vmatprep.subr.mxu0 0.0
    %1687 = vmatpush2.msra.mxu0 0.0
    %1688 = vmatprep.subr.mxu0 0.0
    %1689 = vmatpush2.msra.mxu0 0.0
    %1690 = vmatprep.subr.mxu0 0.0
    %1691 = vmatpush2.msra.mxu0 0.0
    %1692 = vmatprep.subr.mxu0 0.0
    %1693 = vmatpush2.msra.mxu0 0.0
    %1694 = vmatprep.subr.mxu0 0.0
    %1695 = vmatpush2.msra.mxu0 0.0
    %1696 = vmatprep.subr.mxu0 0.0
    %1697 = vmatpush2.msra.mxu0 0.0
    %1698 = vmatprep.subr.mxu0 0.0
    %1699 = vmatpush2.msra.mxu0 0.0
    %1700 = vmatprep.subr.mxu0 0.0
    %1701 = vmatpush2.msra.mxu0 0.0
    %1702 = vmatprep.subr.mxu0 0.0
    %1703 = vmatpush2.msra.mxu0 0.0
    %1704 = vmatprep.subr.mxu0 0.0
    %1705 = vmatpush2.msra.mxu0 0.0
    %1706 = vmatprep.subr.mxu0 0.0
    %1707 = vmatpush2.msra.mxu0 0.0
    %1708 = vmatprep.subr.mxu0 0.0
    %1709 = vmatpush2.msra.mxu0 0.0
    %1710 = vmatprep.subr.mxu0 0.0
    %1711 = vmatpush2.msra.mxu0 0.0
    %1712 = vmatprep.subr.mxu0 0.0
    %1713 = vmatpush2.msra.mxu0 0.0
    %1714 = vmatprep.subr.mxu0 0.0
    %1715 = vmatpush2.msra.mxu0 0.0
    %1716 = vmatprep.mubr.f32.mxu0 0.0
    %1717 = vmatmul.mubr.f32.gmra.mxu0 %v1647
    %v1718 = vpop.f32.mrf.mxu0
    %v1719 = vadd.f32 %v1645, %v1718
    %v1720 = vpop.f32.mrf.mxu0
    %1721 = vmatprep.mubr.f32.mxu0 0.0
    %1722 = vmatmul.mubr.f32.gmra.mxu0 %v1650
    %v1723 = vpop.f32.mrf.mxu0
    %v1724 = vadd.f32 %v1645, %v1723
    %v1725 = vpop.f32.mrf.mxu0
    %1726 = vdwg.mxu0
    %v1727 = vmul.f32 %v1719, 0.5
    %v1728 = vmul.f32 %v1724, 0.5
    %v1729 = vmul.f32 %v1719, 0.70710677
    %v1730 = vmul.f32 %v1724, 0.70710677
    %v1731 = verf.f32.pop %v1729
    %v1732 = verf.f32.pop %v1730
    %v1733 = vadd.f32 %v1731, 1.0
    %v1734 = vadd.f32 %v1732, 1.0
    %v1735 = vmul.f32 %v1727, %v1733
    %v1736 = vmul.f32 %v1728, %v1734
    %v1737 = vld [vmem:[%s5] sm:$0xff]
    %v1738 = vld [vmem:[%s5 + $0x8] sm:$0xff]
    %v1739 = vld [vmem:[%s5 + $0x10] sm:$0xff]
    %v1740 = vld [vmem:[%s5 + $0x18] sm:$0xff]
    %v1741 = vld [vmem:[%s5 + $0x20] sm:$0xff]
    %v1742 = vld [vmem:[%s5 + $0x28] sm:$0xff]
    %v1743 = vld [vmem:[%s5 + $0x30] sm:$0xff]
    %v1744 = vld [vmem:[%s5 + $0x38] sm:$0xff]
    %v1745 = vlaneseq
    %v1746 = vshrl.u32 %v1745, 7
    %v1747 = vsub.s32 3, %v1746
    %v1748 = vrot.slane %v52, %v1747
    %vm1749 = vcmask 523264
    %v1751 = vsel %vm1749, %v1735, 0
    %v1754 = vsel %vm1749, %v1736, 0
    %1756 = vmatprep.subr.mxu0 0.0
    %1757 = vmatpush1.msra.mxu0 0.0
    %1758 = vmatprep.subr.mxu0 0.0
    %1759 = vmatpush1.msra.mxu0 0.0
    %1760 = vmatprep.subr.mxu0 0.0
    %1761 = vmatpush1.msra.mxu0 0.0
    %1762 = vmatprep.subr.mxu0 0.0
    %1763 = vmatpush1.msra.mxu0 0.0
    %1764 = vmatprep.subr.mxu0 0.0
    %1765 = vmatpush1.msra.mxu0 0.0
    %1766 = vmatprep.subr.mxu0 0.0
    %1767 = vmatpush1.msra.mxu0 0.0
    %1768 = vmatprep.subr.mxu0 0.0
    %1769 = vmatpush1.msra.mxu0 0.0
    %1770 = vmatprep.subr.mxu0 0.0
    %1771 = vmatpush1.msra.mxu0 0.0
    %1772 = vmatprep.subr.mxu0 0.0
    %1773 = vmatpush1.msra.mxu0 %v1744
    %1774 = vmatprep.subr.mxu0 0.0
    %1775 = vmatpush1.msra.mxu0 %v1743
    %1776 = vmatprep.subr.mxu0 0.0
    %1777 = vmatpush1.msra.mxu0 %v1742
    %1778 = vmatprep.subr.mxu0 0.0
    %1779 = vmatpush1.msra.mxu0 %v1741
    %1780 = vmatprep.subr.mxu0 0.0
    %1781 = vmatpush1.msra.mxu0 %v1740
    %1782 = vmatprep.subr.mxu0 0.0
    %1783 = vmatpush1.msra.mxu0 %v1739
    %1784 = vmatprep.subr.mxu0 0.0
    %1785 = vmatpush1.msra.mxu0 %v1738
    %1786 = vmatprep.subr.mxu0 0.0
    %1787 = vmatpush1.msra.mxu0 %v1737
    %1788 = vmatprep.subr.mxu0 0.0
    %1789 = vmatpush2.msra.mxu0 0.0
    %1790 = vmatprep.subr.mxu0 0.0
    %1791 = vmatpush2.msra.mxu0 0.0
    %1792 = vmatprep.subr.mxu0 0.0
    %1793 = vmatpush2.msra.mxu0 0.0
    %1794 = vmatprep.subr.mxu0 0.0
    %1795 = vmatpush2.msra.mxu0 0.0
    %1796 = vmatprep.subr.mxu0 0.0
    %1797 = vmatpush2.msra.mxu0 0.0
    %1798 = vmatprep.subr.mxu0 0.0
    %1799 = vmatpush2.msra.mxu0 0.0
    %1800 = vmatprep.subr.mxu0 0.0
    %1801 = vmatpush2.msra.mxu0 0.0
    %1802 = vmatprep.subr.mxu0 0.0
    %1803 = vmatpush2.msra.mxu0 0.0
    %1804 = vmatprep.subr.mxu0 0.0
    %1805 = vmatpush2.msra.mxu0 0.0
    %1806 = vmatprep.subr.mxu0 0.0
    %1807 = vmatpush2.msra.mxu0 0.0
    %1808 = vmatprep.subr.mxu0 0.0
    %1809 = vmatpush2.msra.mxu0 0.0
    %1810 = vmatprep.subr.mxu0 0.0
    %1811 = vmatpush2.msra.mxu0 0.0
    %1812 = vmatprep.subr.mxu0 0.0
    %1813 = vmatpush2.msra.mxu0 0.0
    %1814 = vmatprep.subr.mxu0 0.0
    %1815 = vmatpush2.msra.mxu0 0.0
    %1816 = vmatprep.subr.mxu0 0.0
    %1817 = vmatpush2.msra.mxu0 0.0
    %1818 = vmatprep.subr.mxu0 0.0
    %1819 = vmatpush2.msra.mxu0 0.0
    %1820 = vmatprep.mubr.f32.mxu0 0.0
    %1821 = vmatmul.mubr.f32.gmra.mxu0 %v1751
    %v1822 = vpop.f32.mrf.mxu0
    %v1823 = vadd.f32 %v1748, %v1822
    %v1824 = vpop.f32.mrf.mxu0
    %1825 = vmatprep.mubr.f32.mxu0 0.0
    %1826 = vmatmul.mubr.f32.gmra.mxu0 %v1754
    %v1827 = vpop.f32.mrf.mxu0
    %v1828 = vadd.f32 %v1748, %v1827
    %v1829 = vpop.f32.mrf.mxu0
    %1830 = vdwg.mxu0
    %v1831 = vadd.f32 %v1610, %v1823
    %v1832 = vadd.f32 %v1611, %v1828
    %1833 = vst.msk [vmem:[#allocation7] sm:$0xff] %vm53, %v1831
    %1834 = vst.msk [vmem:[#allocation7 + $0x8] sm:$0xff] %vm53, %v1832
    // Predicated region
    $region34: #{tpu_custom_call.1} parent=1 // pred_check
      _
    $region35: #{tpu_custom_call.1} parent=1 // pred_check_branch
      %1836 = sbr.rel (0) target = $region37
    $region36: #{tpu_custom_call.1} parent=1 // pred_region
      %s1838 = ssub.s32 256, 256
      %1839 = vsyncadd [#allocation4], %s1838
      %s1840 = sshll.u32 [#allocation7], 4
      %s1841 = int_to_ptr.vmem [resolvable:$true] %s1840
      %1846 = dma.vmem_to_hbm [thread:$0]  %s1841, 256, %s6, [#allocation4], 128, 128, 8
    $region37: #{tpu_custom_call.1} parent=1 // pred_fallthru
      _
    // Predicated region
    $region38: #{tpu_custom_call.1} parent=1 // pred_check
      _
    $region39: #{tpu_custom_call.1} parent=1 // pred_check_branch
      %1848 = sbr.rel (0) target = $region41
    $region40: #{tpu_custom_call.1} parent=1 // pred_region
      %1849 = dma.done [#allocation4], 256
    $region41: #{tpu_custom_call.1} parent=1 // pred_fallthru
      _
    %1850 = vsyncpa [#allocation3], 1
    %1851 = vsyncpa [#allocation6], 1
    %1852 = vsyncpa [#allocation4], 1

</llo_original>
